<compile_context>
chip_gen: v6e
topology: v6e:2x2x1
jax: 0.10.0
libtpu: 0.0.40
codegen_flags: <defaults>
</compile_context>

<pallas_src>
import functools

import jax
import jax.numpy as jnp
from jax.experimental import pallas as pl
from jax.experimental.pallas import tpu as pltpu


def _vmem_limit_bytes():
    """Per-generation scoped-VMEM limit (None -> leave compiler default)."""
    kind = ""
    try:
        kind = jax.devices()[0].device_kind.lower()
    except Exception:
        pass
    if "v7" in kind:
        return 60 * 1024 * 1024      # 64 MiB physical per TC on v7x, leave headroom
    if "v5" in kind or "v6" in kind:
        return 100 * 1024 * 1024     # 128 MiB physical on v5e/v6e
    return None


def _choose_hw_tile(hw, cap_cols):
    """Largest multiple-of-128 divisor of hw that fits the VMEM column budget."""
    if hw <= cap_cols:
        return hw
    t = (min(cap_cols, hw) // 128) * 128
    while t >= 128:
        if hw % t == 0:
            return t
        t -= 128
    return hw   # TODO(synk): masked tail tile for awkward HW at production sizes


def _backbone_feat(x, wb_ref, bb_ref, cin):
    """1x1 conv Cin->C + bias + ReLU on a (Cin, tile) slab -> (C, tile) f32."""
    c = wb_ref.shape[0]
    tile = x.shape[1]
    if cin <= 8:
        # Unrolled VPU FMA over the tiny Cin contraction (keeps the MXU free).
        acc = jnp.broadcast_to(bb_ref[...], (c, tile))
        for i in range(cin):
            acc = acc + wb_ref[:, i:i + 1] * x[i:i + 1, :]
    else:
        acc = jnp.dot(wb_ref[...], x, preferred_element_type=jnp.float32) + bb_ref[...]
    return jnp.maximum(acc, 0.0)


def _pass1_kernel(x_ref, wb_ref, bb_ref, wh_ref, bc_ref, bs_ref,
                  seg_ref, cls_ref, akmax_ref, *, num_classes, cin, inv_hw):
    """Per (image, HW-tile): seg logits + GAP sum + running per-class ReLU max."""
    k = num_classes
    t = pl.program_id(1)

    @pl.when(t == 0)
    def _init():
        cls_ref[0] = jnp.zeros((k, 1), jnp.float32)
        akmax_ref[0] = jnp.zeros((k, 1), jnp.float32)   # ReLU scores >= 0

    x = x_ref[0]                                          # (Cin, tile) f32
    feat = _backbone_feat(x, wb_ref, bb_ref, cin)         # (C, tile) f32

    # Fused cls+seg heads: one MXU pass over feat (rows [:K]=cls, [K:]=seg).
    s_all = jnp.dot(wh_ref[...], feat, preferred_element_type=jnp.float32)  # (2K, tile)
    s_cls = s_all[:k, :]
    s_seg = s_all[k:, :]

    # Segmentation logits for this spatial tile (lane-dense store).
    seg_ref[0] = s_seg + bs_ref[...]

    # GAP sum (classification head) and per-class running max of ReLU(s_cls),
    # carried in the revisited (K,1) output blocks.
    cls_ref[0] += jnp.sum(s_cls, axis=1, keepdims=True)
    ak = jnp.maximum(s_cls, 0.0)
    akmax_ref[0] = jnp.maximum(akmax_ref[0], jnp.max(ak, axis=1, keepdims=True))

    @pl.when(t == pl.num_programs(1) - 1)
    def _finalize():
        # GAP commutes with the linear head: mean over HW of s_cls + bias.
        cls_ref[0] = cls_ref[0] * inv_hw + bc_ref[...]


def _pass2_kernel(x_ref, wb_ref, bb_ref, wc_ref, akmax_ref, mask_ref,
                  *, num_classes, cin, threshold, ignore_index):
    """Per (image, HW-tile): recompute cls scores, normalize by global max, mask."""
    k = num_classes
    x = x_ref[0]                                          # (Cin, tile)
    feat = _backbone_feat(x, wb_ref, bb_ref, cin)         # (C, tile)
    s_cls = jnp.dot(wc_ref[...], feat, preferred_element_type=jnp.float32)  # (K, tile)
    ak = jnp.maximum(s_cls, 0.0)

    # Exact reciprocal keeps the 0.25 threshold stable; K reciprocals, not K*tile divides.
    inv = pl.reciprocal(akmax_ref[0] + 1e-8, approx=False)   # (K, 1)
    cam = ak * inv                                            # (K, tile)

    # Fused max + argmax over the class axis: single unrolled compare/select pass.
    best = cam[0:1, :]                                        # (1, tile)
    best_idx = jnp.zeros(best.shape, jnp.int32)
    for c in range(1, k):
        row = cam[c:c + 1, :]
        take = row > best            # strict '>' keeps the first max (torch tie order)
        best = jnp.where(take, row, best)
        best_idx = jnp.where(take, jnp.int32(c), best_idx)

    labels = jnp.where(best < threshold, jnp.int32(ignore_index), best_idx)
    mask_ref[0] = labels                                      # (1, tile) int32, lane-dense


@jax.jit
def single_stage_forward(images, wb, bb, wc, bc, ws, bs):
    """images: (B, Cin, H, W) float32 (NCHW, as in the PyTorch module)."""
    B, Cin, H, W = images.shape
    HW = H * W
    C = wb.shape[0]
    K = wc.shape[0]
    assert K < 255, "ignore_index=255 collides with a class id"

    x = images.reshape(B, Cin, HW)
    bb2 = bb.reshape(C, 1)
    bc2 = bc.reshape(K, 1)
    bs2 = bs.reshape(K, 1)
    # Fused head weights: rows [:K] = classifier, rows [K:] = seg head.  Kept f32
    # so CAM scores / logits match the f32 PyTorch reference (bf16 skipped per review).
    w_heads = jnp.concatenate([wc, ws], axis=0)               # (2K, C)

    # --- per-generation tile sizing -----------------------------------------
    vmem_limit = _vmem_limit_bytes()
    budget = (vmem_limit if vmem_limit is not None else 32 * 1024 * 1024) // 2
    # rough per-lane-column f32 footprint of the pass-1 working set
    bytes_per_col = 4 * (2 * Cin + 4 * K + C + 3 * K + 8)
    cap_cols = max(512, budget // bytes_per_col)
    thw = _choose_hw_tile(HW, cap_cols)
    T = HW // thw

    cparams1 = pltpu.CompilerParams(
        dimension_semantics=("parallel", "arbitrary"),
        vmem_limit_bytes=vmem_limit)
    cparams2 = pltpu.CompilerParams(
        dimension_semantics=("parallel", "parallel"),
        vmem_limit_bytes=vmem_limit)

    # --- pass 1: seg logits + GAP logits + global per-class ReLU max --------
    p1 = functools.partial(_pass1_kernel, num_classes=K, cin=Cin, inv_hw=1.0 / HW)
    logits_seg, logits_cls, ak_max = pl.pallas_call(
        p1,
        out_shape=(
            jax.ShapeDtypeStruct((B, K, HW), jnp.float32),    # logits_seg
            jax.ShapeDtypeStruct((B, K, 1), jnp.float32),     # logits_cls (sublane-major)
            jax.ShapeDtypeStruct((B, K, 1), jnp.float32),     # per-(b,k) ReLU max
        ),
        grid=(B, T),
        in_specs=[
            pl.BlockSpec((1, Cin, thw), lambda b, t: (b, 0, t)),   # image tile
            pl.BlockSpec((C, Cin), lambda b, t: (0, 0)),           # backbone weight
            pl.BlockSpec((C, 1), lambda b, t: (0, 0)),             # backbone bias
            pl.BlockSpec((2 * K, C), lambda b, t: (0, 0)),         # fused head weights
            pl.BlockSpec((K, 1), lambda b, t: (0, 0)),             # classifier bias
            pl.BlockSpec((K, 1), lambda b, t: (0, 0)),             # seg head bias
        ],
        out_specs=[
            pl.BlockSpec((1, K, thw), lambda b, t: (b, 0, t)),
            pl.BlockSpec((1, K, 1), lambda b, t: (b, 0, 0)),
            pl.BlockSpec((1, K, 1), lambda b, t: (b, 0, 0)),
        ],
        compiler_params=cparams1,
    )(x, wb, bb2, w_heads, bc2, bs2)

    # --- pass 2: CAM normalize + fused max/argmax + threshold -> pseudo mask -
    p2 = functools.partial(_pass2_kernel, num_classes=K, cin=Cin,
                           threshold=0.25, ignore_index=255)
    masks = pl.pallas_call(
        p2,
        out_shape=jax.ShapeDtypeStruct((B, 1, HW), jnp.int32),
        grid=(B, T),
        in_specs=[
            pl.BlockSpec((1, Cin, thw), lambda b, t: (b, 0, t)),
            pl.BlockSpec((C, Cin), lambda b, t: (0, 0)),
            pl.BlockSpec((C, 1), lambda b, t: (0, 0)),
            pl.BlockSpec((K, C), lambda b, t: (0, 0)),             # classifier weight only
            pl.BlockSpec((1, K, 1), lambda b, t: (b, 0, 0)),       # global per-class max
        ],
        out_specs=pl.BlockSpec((1, 1, thw), lambda b, t: (b, 0, t)),
        compiler_params=cparams2,
    )(x, wb, bb2, wc, ak_max)

    return {
        "logits_cls": logits_cls[:, :, 0],                   # (B, K)
        "logits_seg": logits_seg.reshape(B, K, H, W),
        "pseudo_masks": masks.reshape(B, H, W),               # int32, 255 = ignore
    }


if __name__ == "__main__":
    B, Cin, H, W = 2, 4, 16, 16
    C, K = 32, 4   # feature channels, num classes

    key = jax.random.PRNGKey(0)
    k_img, k_wb, k_bb, k_wc, k_bc, k_ws, k_bs = jax.random.split(key, 7)

    images = jax.random.normal(k_img, (B, Cin, H, W), jnp.float32)
    wb = 0.3 * jax.random.normal(k_wb, (C, Cin), jnp.float32)   # backbone 1x1 conv weight
    bb = 0.1 * jax.random.normal(k_bb, (C,), jnp.float32)
    wc = 0.3 * jax.random.normal(k_wc, (K, C), jnp.float32)     # classification_head.weight
    bc = 0.1 * jax.random.normal(k_bc, (K,), jnp.float32)
    ws = 0.3 * jax.random.normal(k_ws, (K, C), jnp.float32)     # segmentation head 1x1 conv weight
    bs = 0.1 * jax.random.normal(k_bs, (K,), jnp.float32)

    out = single_stage_forward(images, wb, bb, wc, bc, ws, bs)
    out = jax.tree_util.tree_map(jax.block_until_ready, out)

    # The PyTorch module prints the ignore-pixel ratio; computed here but not
    # printed so the only output on success is "KERNEL_OK".
    ignore_ratio = (out["pseudo_masks"] == 255).sum() / out["pseudo_masks"].size
    _ = jax.block_until_ready(ignore_ratio)

    assert out["logits_cls"].shape == (B, K)
    assert out["logits_seg"].shape == (B, K, H, W)
    assert out["pseudo_masks"].shape == (B, H, W)
    assert out["pseudo_masks"].dtype == jnp.int32
    print("KERNEL_OK")
</pallas_src>

<mosaic_0001>
module attributes {stable_mosaic.version = 11 : i64} {
  func.func @_pass2_kernel(%arg0: i32, %arg1: i32, %arg2: memref<1x4x256xf32, #tpu.memory_space<vmem>>, %arg3: memref<32x4xf32, #tpu.memory_space<vmem>>, %arg4: memref<32x1xf32, #tpu.memory_space<vmem>>, %arg5: memref<4x32xf32, #tpu.memory_space<vmem>>, %arg6: memref<1x4x1xf32, #tpu.memory_space<vmem>>, %arg7: memref<1x1x256xi32, #tpu.memory_space<vmem>>) attributes {dimension_semantics = [#tpu.dimension_semantics<parallel>, #tpu.dimension_semantics<parallel>], iteration_bounds = array<i64: 2, 1>, scalar_prefetch = 0 : i64, scratch_operands = 0 : i64, tpu.core_type = #tpu.core_type<tc>, window_params = [{transform_indices = @transform_0, window_bounds = array<i64: 1, 4, 256>}, {pipeline_mode = #tpu.pipeline_mode<synchronous>, transform_indices = @transform_1, window_bounds = array<i64: 32, 4>}, {pipeline_mode = #tpu.pipeline_mode<synchronous>, transform_indices = @transform_2, window_bounds = array<i64: 32, 1>}, {pipeline_mode = #tpu.pipeline_mode<synchronous>, transform_indices = @transform_3, window_bounds = array<i64: 4, 32>}, {transform_indices = @transform_4, window_bounds = array<i64: 1, 4, 1>}, {transform_indices = @transform_5, window_bounds = array<i64: 1, 1, 256>}]} {
    %c0 = arith.constant 0 : index
    %c0_0 = arith.constant 0 : index
    %c0_1 = arith.constant 0 : index
    %0 = vector.load %arg2[%c0, %c0_0, %c0_1] : memref<1x4x256xf32, #tpu.memory_space<vmem>>, vector<1x4x256xf32>
    %1 = vector.shape_cast %0 : vector<1x4x256xf32> to vector<4x256xf32>
    %c0_2 = arith.constant 0 : index
    %c0_3 = arith.constant 0 : index
    %2 = vector.load %arg4[%c0_2, %c0_3] : memref<32x1xf32, #tpu.memory_space<vmem>>, vector<32x1xf32>
    %3 = vector.shape_cast %2 : vector<32x1xf32> to vector<32x1xf32>
    %4 = vector.broadcast %3 : vector<32x1xf32> to vector<32x256xf32>
    %c0_4 = arith.constant 0 : index
    %c0_5 = arith.constant 0 : index
    %5 = vector.load %arg3[%c0_4, %c0_5] : memref<32x4xf32, #tpu.memory_space<vmem>>, vector<32x1xf32>
    %6 = vector.extract_strided_slice %1 {offsets = [0, 0], sizes = [1, 256], strides = [1, 1]} : vector<4x256xf32> to vector<1x256xf32>
    %7 = vector.broadcast %5 : vector<32x1xf32> to vector<32x256xf32>
    %8 = vector.broadcast %6 : vector<1x256xf32> to vector<32x256xf32>
    %9 = arith.mulf %7, %8 : vector<32x256xf32>
    %10 = arith.addf %4, %9 : vector<32x256xf32>
    %c0_6 = arith.constant 0 : index
    %c1 = arith.constant 1 : index
    %11 = vector.load %arg3[%c0_6, %c1] : memref<32x4xf32, #tpu.memory_space<vmem>>, vector<32x1xf32>
    %12 = vector.extract_strided_slice %1 {offsets = [1, 0], sizes = [1, 256], strides = [1, 1]} : vector<4x256xf32> to vector<1x256xf32>
    %13 = vector.broadcast %11 : vector<32x1xf32> to vector<32x256xf32>
    %14 = vector.broadcast %12 : vector<1x256xf32> to vector<32x256xf32>
    %15 = arith.mulf %13, %14 : vector<32x256xf32>
    %16 = arith.addf %10, %15 : vector<32x256xf32>
    %c0_7 = arith.constant 0 : index
    %c2 = arith.constant 2 : index
    %17 = vector.load %arg3[%c0_7, %c2] : memref<32x4xf32, #tpu.memory_space<vmem>>, vector<32x1xf32>
    %18 = vector.extract_strided_slice %1 {offsets = [2, 0], sizes = [1, 256], strides = [1, 1]} : vector<4x256xf32> to vector<1x256xf32>
    %19 = vector.broadcast %17 : vector<32x1xf32> to vector<32x256xf32>
    %20 = vector.broadcast %18 : vector<1x256xf32> to vector<32x256xf32>
    %21 = arith.mulf %19, %20 : vector<32x256xf32>
    %22 = arith.addf %16, %21 : vector<32x256xf32>
    %c0_8 = arith.constant 0 : index
    %c3 = arith.constant 3 : index
    %23 = vector.load %arg3[%c0_8, %c3] : memref<32x4xf32, #tpu.memory_space<vmem>>, vector<32x1xf32>
    %24 = vector.extract_strided_slice %1 {offsets = [3, 0], sizes = [1, 256], strides = [1, 1]} : vector<4x256xf32> to vector<1x256xf32>
    %25 = vector.broadcast %23 : vector<32x1xf32> to vector<32x256xf32>
    %26 = vector.broadcast %24 : vector<1x256xf32> to vector<32x256xf32>
    %27 = arith.mulf %25, %26 : vector<32x256xf32>
    %28 = arith.addf %22, %27 : vector<32x256xf32>
    %cst = arith.constant 0.000000e+00 : f32
    %29 = vector.broadcast %cst : f32 to vector<32x256xf32>
    %30 = arith.maximumf %28, %29 : vector<32x256xf32>
    %c0_9 = arith.constant 0 : index
    %c0_10 = arith.constant 0 : index
    %31 = vector.load %arg5[%c0_9, %c0_10] : memref<4x32xf32, #tpu.memory_space<vmem>>, vector<4x32xf32>
    %cst_11 = arith.constant dense<0.000000e+00> : vector<4x256xf32>
    %32 = tpu.matmul %31, %30, %cst_11 {dimension_numbers = #tpu.dot_dimension_numbers<[1], [0], [0], [1], [0, 0, 1, 1], [], []>} : vector<4x32xf32>, vector<32x256xf32>, vector<4x256xf32> -> vector<4x256xf32>
    %cst_12 = arith.constant 0.000000e+00 : f32
    %33 = vector.broadcast %cst_12 : f32 to vector<4x256xf32>
    %34 = arith.maximumf %32, %33 : vector<4x256xf32>
    %c0_13 = arith.constant 0 : index
    %c0_14 = arith.constant 0 : index
    %c0_15 = arith.constant 0 : index
    %35 = vector.load %arg6[%c0_13, %c0_14, %c0_15] : memref<1x4x1xf32, #tpu.memory_space<vmem>>, vector<1x4x1xf32>
    %36 = vector.shape_cast %35 : vector<1x4x1xf32> to vector<4x1xf32>
    %cst_16 = arith.constant 9.99999993E-9 : f32
    %37 = vector.broadcast %cst_16 : f32 to vector<4x1xf32>
    %38 = arith.addf %36, %37 : vector<4x1xf32>
    %39 = tpu.reciprocal %38 : vector<4x1xf32> -> vector<4x1xf32>
    %40 = vector.broadcast %39 : vector<4x1xf32> to vector<4x256xf32>
    %41 = arith.mulf %34, %40 : vector<4x256xf32>
    %42 = vector.extract_strided_slice %41 {offsets = [0, 0], sizes = [1, 256], strides = [1, 1]} : vector<4x256xf32> to vector<1x256xf32>
    %c0_i32 = arith.constant 0 : i32
    %43 = vector.broadcast %c0_i32 : i32 to vector<1x256xi32>
    %44 = vector.extract_strided_slice %41 {offsets = [1, 0], sizes = [1, 256], strides = [1, 1]} : vector<4x256xf32> to vector<1x256xf32>
    %45 = arith.cmpf ogt, %44, %42 : vector<1x256xf32>
    %46 = arith.select %45, %44, %42 : vector<1x256xi1>, vector<1x256xf32>
    %c1_i32 = arith.constant 1 : i32
    %47 = vector.broadcast %c1_i32 : i32 to vector<1x256xi32>
    %48 = arith.select %45, %47, %43 : vector<1x256xi1>, vector<1x256xi32>
    %49 = vector.extract_strided_slice %41 {offsets = [2, 0], sizes = [1, 256], strides = [1, 1]} : vector<4x256xf32> to vector<1x256xf32>
    %50 = arith.cmpf ogt, %49, %46 : vector<1x256xf32>
    %51 = arith.select %50, %49, %46 : vector<1x256xi1>, vector<1x256xf32>
    %c2_i32 = arith.constant 2 : i32
    %52 = vector.broadcast %c2_i32 : i32 to vector<1x256xi32>
    %53 = arith.select %50, %52, %48 : vector<1x256xi1>, vector<1x256xi32>
    %54 = vector.extract_strided_slice %41 {offsets = [3, 0], sizes = [1, 256], strides = [1, 1]} : vector<4x256xf32> to vector<1x256xf32>
    %55 = arith.cmpf ogt, %54, %51 : vector<1x256xf32>
    %56 = arith.select %55, %54, %51 : vector<1x256xi1>, vector<1x256xf32>
    %c3_i32 = arith.constant 3 : i32
    %57 = vector.broadcast %c3_i32 : i32 to vector<1x256xi32>
    %58 = arith.select %55, %57, %53 : vector<1x256xi1>, vector<1x256xi32>
    %cst_17 = arith.constant 2.500000e-01 : f32
    %59 = vector.broadcast %cst_17 : f32 to vector<1x256xf32>
    %60 = arith.cmpf olt, %56, %59 : vector<1x256xf32>
    %c255_i32 = arith.constant 255 : i32
    %61 = vector.broadcast %c255_i32 : i32 to vector<1x256xi32>
    %62 = arith.select %60, %61, %58 : vector<1x256xi1>, vector<1x256xi32>
    %c0_18 = arith.constant 0 : index
    %c0_19 = arith.constant 0 : index
    %c0_20 = arith.constant 0 : index
    %63 = vector.load %arg7[%c0_18, %c0_19, %c0_20] : memref<1x1x256xi32, #tpu.memory_space<vmem>>, vector<1x1x256xi32>
    %64 = vector.shape_cast %63 : vector<1x1x256xi32> to vector<1x256xi32>
    %65 = vector.shape_cast %62 : vector<1x256xi32> to vector<1x1x256xi32>
    tpu.vector_store %arg7[%c0_18, %c0_19, %c0_20], %65 {strides = array<i32>} : memref<1x1x256xi32, #tpu.memory_space<vmem>>, vector<1x1x256xi32>,
    return
  }
  func.func @transform_0(%arg0: i32, %arg1: i32) -> (i32, i32, i32) {
    %c0_i32 = arith.constant 0 : i32
    %c0_i32_0 = arith.constant 0 : i32
    return %arg0, %c0_i32, %arg1 : i32, i32, i32
  }
  func.func @transform_1(%arg0: i32, %arg1: i32) -> (i32, i32) {
    %c0_i32 = arith.constant 0 : i32
    %c0_i32_0 = arith.constant 0 : i32
    %c0_i32_1 = arith.constant 0 : i32
    return %c0_i32, %c0_i32_0 : i32, i32
  }
  func.func @transform_2(%arg0: i32, %arg1: i32) -> (i32, i32) {
    %c0_i32 = arith.constant 0 : i32
    %c0_i32_0 = arith.constant 0 : i32
    %c0_i32_1 = arith.constant 0 : i32
    return %c0_i32, %c0_i32_0 : i32, i32
  }
  func.func @transform_3(%arg0: i32, %arg1: i32) -> (i32, i32) {
    %c0_i32 = arith.constant 0 : i32
    %c0_i32_0 = arith.constant 0 : i32
    %c0_i32_1 = arith.constant 0 : i32
    return %c0_i32, %c0_i32_0 : i32, i32
  }
  func.func @transform_4(%arg0: i32, %arg1: i32) -> (i32, i32, i32) {
    %c0_i32 = arith.constant 0 : i32
    %c0_i32_0 = arith.constant 0 : i32
    %c0_i32_1 = arith.constant 0 : i32
    return %arg0, %c0_i32, %c0_i32_0 : i32, i32, i32
  }
  func.func @transform_5(%arg0: i32, %arg1: i32) -> (i32, i32, i32) {
    %c0_i32 = arith.constant 0 : i32
    %c0_i32_0 = arith.constant 0 : i32
    return %arg0, %c0_i32, %arg1 : i32, i32, i32
  }
}

module attributes {stable_mosaic.version = 11 : i64} {
  func.func @_pass1_kernel(%arg0: i32, %arg1: i32, %arg2: memref<1x4x256xf32, #tpu.memory_space<vmem>>, %arg3: memref<32x4xf32, #tpu.memory_space<vmem>>, %arg4: memref<32x1xf32, #tpu.memory_space<vmem>>, %arg5: memref<8x32xf32, #tpu.memory_space<vmem>>, %arg6: memref<4x1xf32, #tpu.memory_space<vmem>>, %arg7: memref<4x1xf32, #tpu.memory_space<vmem>>, %arg8: memref<1x4x256xf32, #tpu.memory_space<vmem>>, %arg9: memref<1x4x1xf32, #tpu.memory_space<vmem>>, %arg10: memref<1x4x1xf32, #tpu.memory_space<vmem>>) attributes {dimension_semantics = [#tpu.dimension_semantics<parallel>, #tpu.dimension_semantics<arbitrary>], iteration_bounds = array<i64: 2, 1>, scalar_prefetch = 0 : i64, scratch_operands = 0 : i64, tpu.core_type = #tpu.core_type<tc>, window_params = [{transform_indices = @transform_0, window_bounds = array<i64: 1, 4, 256>}, {pipeline_mode = #tpu.pipeline_mode<synchronous>, transform_indices = @transform_1, window_bounds = array<i64: 32, 4>}, {pipeline_mode = #tpu.pipeline_mode<synchronous>, transform_indices = @transform_2, window_bounds = array<i64: 32, 1>}, {pipeline_mode = #tpu.pipeline_mode<synchronous>, transform_indices = @transform_3, window_bounds = array<i64: 8, 32>}, {pipeline_mode = #tpu.pipeline_mode<synchronous>, transform_indices = @transform_4, window_bounds = array<i64: 4, 1>}, {pipeline_mode = #tpu.pipeline_mode<synchronous>, transform_indices = @transform_5, window_bounds = array<i64: 4, 1>}, {transform_indices = @transform_6, window_bounds = array<i64: 1, 4, 256>}, {transform_indices = @transform_7, window_bounds = array<i64: 1, 4, 1>}, {transform_indices = @transform_8, window_bounds = array<i64: 1, 4, 1>}]} {
    %c0_i32 = arith.constant 0 : i32
    %0 = arith.cmpi eq, %arg1, %c0_i32 : i32
    %1 = arith.extui %0 : i1 to i32
    %c0_i32_0 = arith.constant 0 : i32
    %2 = arith.cmpi ne, %1, %c0_i32_0 : i32
    scf.if %2 {
      %cst_35 = arith.constant 0.000000e+00 : f32
      %65 = vector.broadcast %cst_35 : f32 to vector<4x1xf32>
      %c0_36 = arith.constant 0 : index
      %c0_37 = arith.constant 0 : index
      %c0_38 = arith.constant 0 : index
      %66 = vector.load %arg9[%c0_36, %c0_37, %c0_38] : memref<1x4x1xf32, #tpu.memory_space<vmem>>, vector<1x4x1xf32>
      %67 = vector.shape_cast %66 : vector<1x4x1xf32> to vector<4x1xf32>
      %68 = vector.shape_cast %65 : vector<4x1xf32> to vector<1x4x1xf32>
      tpu.vector_store %arg9[%c0_36, %c0_37, %c0_38], %68 {strides = array<i32>} : memref<1x4x1xf32, #tpu.memory_space<vmem>>, vector<1x4x1xf32>,
      %cst_39 = arith.constant 0.000000e+00 : f32
      %69 = vector.broadcast %cst_39 : f32 to vector<4x1xf32>
      %c0_40 = arith.constant 0 : index
      %c0_41 = arith.constant 0 : index
      %c0_42 = arith.constant 0 : index
      %70 = vector.load %arg10[%c0_40, %c0_41, %c0_42] : memref<1x4x1xf32, #tpu.memory_space<vmem>>, vector<1x4x1xf32>
      %71 = vector.shape_cast %70 : vector<1x4x1xf32> to vector<4x1xf32>
      %72 = vector.shape_cast %69 : vector<4x1xf32> to vector<1x4x1xf32>
      tpu.vector_store %arg10[%c0_40, %c0_41, %c0_42], %72 {strides = array<i32>} : memref<1x4x1xf32, #tpu.memory_space<vmem>>, vector<1x4x1xf32>,
    } else {
    }
    %c0 = arith.constant 0 : index
    %c0_1 = arith.constant 0 : index
    %c0_2 = arith.constant 0 : index
    %3 = vector.load %arg2[%c0, %c0_1, %c0_2] : memref<1x4x256xf32, #tpu.memory_space<vmem>>, vector<1x4x256xf32>
    %4 = vector.shape_cast %3 : vector<1x4x256xf32> to vector<4x256xf32>
    %c0_3 = arith.constant 0 : index
    %c0_4 = arith.constant 0 : index
    %5 = vector.load %arg4[%c0_3, %c0_4] : memref<32x1xf32, #tpu.memory_space<vmem>>, vector<32x1xf32>
    %6 = vector.shape_cast %5 : vector<32x1xf32> to vector<32x1xf32>
    %7 = vector.broadcast %6 : vector<32x1xf32> to vector<32x256xf32>
    %c0_5 = arith.constant 0 : index
    %c0_6 = arith.constant 0 : index
    %8 = vector.load %arg3[%c0_5, %c0_6] : memref<32x4xf32, #tpu.memory_space<vmem>>, vector<32x1xf32>
    %9 = vector.extract_strided_slice %4 {offsets = [0, 0], sizes = [1, 256], strides = [1, 1]} : vector<4x256xf32> to vector<1x256xf32>
    %10 = vector.broadcast %8 : vector<32x1xf32> to vector<32x256xf32>
    %11 = vector.broadcast %9 : vector<1x256xf32> to vector<32x256xf32>
    %12 = arith.mulf %10, %11 : vector<32x256xf32>
    %13 = arith.addf %7, %12 : vector<32x256xf32>
    %c0_7 = arith.constant 0 : index
    %c1 = arith.constant 1 : index
    %14 = vector.load %arg3[%c0_7, %c1] : memref<32x4xf32, #tpu.memory_space<vmem>>, vector<32x1xf32>
    %15 = vector.extract_strided_slice %4 {offsets = [1, 0], sizes = [1, 256], strides = [1, 1]} : vector<4x256xf32> to vector<1x256xf32>
    %16 = vector.broadcast %14 : vector<32x1xf32> to vector<32x256xf32>
    %17 = vector.broadcast %15 : vector<1x256xf32> to vector<32x256xf32>
    %18 = arith.mulf %16, %17 : vector<32x256xf32>
    %19 = arith.addf %13, %18 : vector<32x256xf32>
    %c0_8 = arith.constant 0 : index
    %c2 = arith.constant 2 : index
    %20 = vector.load %arg3[%c0_8, %c2] : memref<32x4xf32, #tpu.memory_space<vmem>>, vector<32x1xf32>
    %21 = vector.extract_strided_slice %4 {offsets = [2, 0], sizes = [1, 256], strides = [1, 1]} : vector<4x256xf32> to vector<1x256xf32>
    %22 = vector.broadcast %20 : vector<32x1xf32> to vector<32x256xf32>
    %23 = vector.broadcast %21 : vector<1x256xf32> to vector<32x256xf32>
    %24 = arith.mulf %22, %23 : vector<32x256xf32>
    %25 = arith.addf %19, %24 : vector<32x256xf32>
    %c0_9 = arith.constant 0 : index
    %c3 = arith.constant 3 : index
    %26 = vector.load %arg3[%c0_9, %c3] : memref<32x4xf32, #tpu.memory_space<vmem>>, vector<32x1xf32>
    %27 = vector.extract_strided_slice %4 {offsets = [3, 0], sizes = [1, 256], strides = [1, 1]} : vector<4x256xf32> to vector<1x256xf32>
    %28 = vector.broadcast %26 : vector<32x1xf32> to vector<32x256xf32>
    %29 = vector.broadcast %27 : vector<1x256xf32> to vector<32x256xf32>
    %30 = arith.mulf %28, %29 : vector<32x256xf32>
    %31 = arith.addf %25, %30 : vector<32x256xf32>
    %cst = arith.constant 0.000000e+00 : f32
    %32 = vector.broadcast %cst : f32 to vector<32x256xf32>
    %33 = arith.maximumf %31, %32 : vector<32x256xf32>
    %c0_10 = arith.constant 0 : index
    %c0_11 = arith.constant 0 : index
    %34 = vector.load %arg5[%c0_10, %c0_11] : memref<8x32xf32, #tpu.memory_space<vmem>>, vector<8x32xf32>
    %cst_12 = arith.constant dense<0.000000e+00> : vector<8x256xf32>
    %35 = tpu.matmul %34, %33, %cst_12 {dimension_numbers = #tpu.dot_dimension_numbers<[1], [0], [0], [1], [0, 0, 1, 1], [], []>} : vector<8x32xf32>, vector<32x256xf32>, vector<8x256xf32> -> vector<8x256xf32>
    %36 = vector.extract_strided_slice %35 {offsets = [0, 0], sizes = [4, 256], strides = [1, 1]} : vector<8x256xf32> to vector<4x256xf32>
    %37 = vector.extract_strided_slice %35 {offsets = [4, 0], sizes = [4, 256], strides = [1, 1]} : vector<8x256xf32> to vector<4x256xf32>
    %c0_13 = arith.constant 0 : index
    %c0_14 = arith.constant 0 : index
    %38 = vector.load %arg7[%c0_13, %c0_14] : memref<4x1xf32, #tpu.memory_space<vmem>>, vector<4x1xf32>
    %39 = vector.broadcast %38 : vector<4x1xf32> to vector<4x256xf32>
    %40 = arith.addf %37, %39 : vector<4x256xf32>
    %c0_15 = arith.constant 0 : index
    %c0_16 = arith.constant 0 : index
    %c0_17 = arith.constant 0 : index
    %41 = vector.load %arg8[%c0_15, %c0_16, %c0_17] : memref<1x4x256xf32, #tpu.memory_space<vmem>>, vector<1x4x256xf32>
    %42 = vector.shape_cast %41 : vector<1x4x256xf32> to vector<4x256xf32>
    %43 = vector.shape_cast %40 : vector<4x256xf32> to vector<1x4x256xf32>
    tpu.vector_store %arg8[%c0_15, %c0_16, %c0_17], %43 {strides = array<i32>} : memref<1x4x256xf32, #tpu.memory_space<vmem>>, vector<1x4x256xf32>,
    %c0_18 = arith.constant 0 : index
    %c0_19 = arith.constant 0 : index
    %c0_20 = arith.constant 0 : index
    %44 = vector.load %arg9[%c0_18, %c0_19, %c0_20] : memref<1x4x1xf32, #tpu.memory_space<vmem>>, vector<1x4x1xf32>
    %45 = vector.shape_cast %44 : vector<1x4x1xf32> to vector<4x1xf32>
    %cst_21 = arith.constant dense<0.000000e+00> : vector<4xf32>
    %46 = vector.multi_reduction <add>, %36, %cst_21 [1] : vector<4x256xf32> to vector<4xf32>
    %47 = vector.shape_cast %46 : vector<4xf32> to vector<4x1xf32>
    %48 = arith.addf %45, %47 : vector<4x1xf32>
    %c0_22 = arith.constant 0 : index
    %c0_23 = arith.constant 0 : index
    %c0_24 = arith.constant 0 : index
    %49 = vector.load %arg9[%c0_22, %c0_23, %c0_24] : memref<1x4x1xf32, #tpu.memory_space<vmem>>, vector<1x4x1xf32>
    %50 = vector.shape_cast %49 : vector<1x4x1xf32> to vector<4x1xf32>
    %51 = vector.shape_cast %48 : vector<4x1xf32> to vector<1x4x1xf32>
    tpu.vector_store %arg9[%c0_22, %c0_23, %c0_24], %51 {strides = array<i32>} : memref<1x4x1xf32, #tpu.memory_space<vmem>>, vector<1x4x1xf32>,
    %cst_25 = arith.constant 0.000000e+00 : f32
    %52 = vector.broadcast %cst_25 : f32 to vector<4x256xf32>
    %53 = arith.maximumf %36, %52 : vector<4x256xf32>
    %c0_26 = arith.constant 0 : index
    %c0_27 = arith.constant 0 : index
    %c0_28 = arith.constant 0 : index
    %54 = vector.load %arg10[%c0_26, %c0_27, %c0_28] : memref<1x4x1xf32, #tpu.memory_space<vmem>>, vector<1x4x1xf32>
    %55 = vector.shape_cast %54 : vector<1x4x1xf32> to vector<4x1xf32>
    %cst_29 = arith.constant dense<0xFF800000> : vector<4xf32>
    %56 = vector.multi_reduction <maximumf>, %53, %cst_29 [1] : vector<4x256xf32> to vector<4xf32>
    %57 = vector.shape_cast %56 : vector<4xf32> to vector<4x1xf32>
    %58 = arith.maximumf %55, %57 : vector<4x1xf32>
    %c0_30 = arith.constant 0 : index
    %c0_31 = arith.constant 0 : index
    %c0_32 = arith.constant 0 : index
    %59 = vector.load %arg10[%c0_30, %c0_31, %c0_32] : memref<1x4x1xf32, #tpu.memory_space<vmem>>, vector<1x4x1xf32>
    %60 = vector.shape_cast %59 : vector<1x4x1xf32> to vector<4x1xf32>
    %61 = vector.shape_cast %58 : vector<4x1xf32> to vector<1x4x1xf32>
    tpu.vector_store %arg10[%c0_30, %c0_31, %c0_32], %61 {strides = array<i32>} : memref<1x4x1xf32, #tpu.memory_space<vmem>>, vector<1x4x1xf32>,
    %c0_i32_33 = arith.constant 0 : i32
    %62 = arith.cmpi eq, %arg1, %c0_i32_33 : i32
    %63 = arith.extui %62 : i1 to i32
    %c0_i32_34 = arith.constant 0 : i32
    %64 = arith.cmpi ne, %63, %c0_i32_34 : i32
    scf.if %64 {
      %c0_35 = arith.constant 0 : index
      %c0_36 = arith.constant 0 : index
      %c0_37 = arith.constant 0 : index
      %65 = vector.load %arg9[%c0_35, %c0_36, %c0_37] : memref<1x4x1xf32, #tpu.memory_space<vmem>>, vector<1x4x1xf32>
      %66 = vector.shape_cast %65 : vector<1x4x1xf32> to vector<4x1xf32>
      %cst_38 = arith.constant 3.906250e-03 : f32
      %67 = vector.broadcast %cst_38 : f32 to vector<4x1xf32>
      %68 = arith.mulf %66, %67 : vector<4x1xf32>
      %c0_39 = arith.constant 0 : index
      %c0_40 = arith.constant 0 : index
      %69 = vector.load %arg6[%c0_39, %c0_40] : memref<4x1xf32, #tpu.memory_space<vmem>>, vector<4x1xf32>
      %70 = arith.addf %68, %69 : vector<4x1xf32>
      %c0_41 = arith.constant 0 : index
      %c0_42 = arith.constant 0 : index
      %c0_43 = arith.constant 0 : index
      %71 = vector.load %arg9[%c0_41, %c0_42, %c0_43] : memref<1x4x1xf32, #tpu.memory_space<vmem>>, vector<1x4x1xf32>
      %72 = vector.shape_cast %71 : vector<1x4x1xf32> to vector<4x1xf32>
      %73 = vector.shape_cast %70 : vector<4x1xf32> to vector<1x4x1xf32>
      tpu.vector_store %arg9[%c0_41, %c0_42, %c0_43], %73 {strides = array<i32>} : memref<1x4x1xf32, #tpu.memory_space<vmem>>, vector<1x4x1xf32>,
    } else {
    }
    return
  }
  func.func @transform_0(%arg0: i32, %arg1: i32) -> (i32, i32, i32) {
    %c0_i32 = arith.constant 0 : i32
    %c0_i32_0 = arith.constant 0 : i32
    return %arg0, %c0_i32, %arg1 : i32, i32, i32
  }
  func.func @transform_1(%arg0: i32, %arg1: i32) -> (i32, i32) {
    %c0_i32 = arith.constant 0 : i32
    %c0_i32_0 = arith.constant 0 : i32
    %c0_i32_1 = arith.constant 0 : i32
    return %c0_i32, %c0_i32_0 : i32, i32
  }
  func.func @transform_2(%arg0: i32, %arg1: i32) -> (i32, i32) {
    %c0_i32 = arith.constant 0 : i32
    %c0_i32_0 = arith.constant 0 : i32
    %c0_i32_1 = arith.constant 0 : i32
    return %c0_i32, %c0_i32_0 : i32, i32
  }
  func.func @transform_3(%arg0: i32, %arg1: i32) -> (i32, i32) {
    %c0_i32 = arith.constant 0 : i32
    %c0_i32_0 = arith.constant 0 : i32
    %c0_i32_1 = arith.constant 0 : i32
    return %c0_i32, %c0_i32_0 : i32, i32
  }
  func.func @transform_4(%arg0: i32, %arg1: i32) -> (i32, i32) {
    %c0_i32 = arith.constant 0 : i32
    %c0_i32_0 = arith.constant 0 : i32
    %c0_i32_1 = arith.constant 0 : i32
    return %c0_i32, %c0_i32_0 : i32, i32
  }
  func.func @transform_5(%arg0: i32, %arg1: i32) -> (i32, i32) {
    %c0_i32 = arith.constant 0 : i32
    %c0_i32_0 = arith.constant 0 : i32
    %c0_i32_1 = arith.constant 0 : i32
    return %c0_i32, %c0_i32_0 : i32, i32
  }
  func.func @transform_6(%arg0: i32, %arg1: i32) -> (i32, i32, i32) {
    %c0_i32 = arith.constant 0 : i32
    %c0_i32_0 = arith.constant 0 : i32
    return %arg0, %c0_i32, %arg1 : i32, i32, i32
  }
  func.func @transform_7(%arg0: i32, %arg1: i32) -> (i32, i32, i32) {
    %c0_i32 = arith.constant 0 : i32
    %c0_i32_0 = arith.constant 0 : i32
    %c0_i32_1 = arith.constant 0 : i32
    return %arg0, %c0_i32, %c0_i32_0 : i32, i32, i32
  }
  func.func @transform_8(%arg0: i32, %arg1: i32) -> (i32, i32, i32) {
    %c0_i32 = arith.constant 0 : i32
    %c0_i32_0 = arith.constant 0 : i32
    %c0_i32_1 = arith.constant 0 : i32
    return %arg0, %c0_i32, %c0_i32_0 : i32, i32, i32
  }
}

</mosaic_0001>

<llo_original>
// kernel: single_stage_forward.2
$region0: #{single_stage_forward.2}
  #allocation0 [shape = 'u32[]', space=smem, size = 0x4, offset = 0x4, fixed_abs, tag = 'smem constant byte address 0x4 - core index']
  #allocation1 [shape = 'u32[144,128]{1,0:T(1,128)}', space=vmem, size = 0x12000, scoped, tag = 'internal scratch']
  %s0 = inlined_call_operand.vmem [shape: f32[2,4,256], index: 0, kind: input, shape index: {}]
  %s1 = inlined_call_operand.vmem [shape: f32[32,4], index: 1, kind: input, shape index: {}]
  %s2 = inlined_call_operand.vmem [shape: f32[32,1], index: 2, kind: input, shape index: {}]
  %s3 = inlined_call_operand.vmem [shape: f32[8,32], index: 3, kind: input, shape index: {}]
  %s4 = inlined_call_operand.vmem [shape: f32[4,1], index: 4, kind: input, shape index: {}]
  %s5 = inlined_call_operand.vmem [shape: f32[4,1], index: 5, kind: input, shape index: {}]
  %s6 = inlined_call_operand.vmem [shape: f32[2,4,256], index: 6, kind: output, shape index: {0}]
  %s7 = inlined_call_operand.vmem [shape: f32[2,4,1], index: 7, kind: output, shape index: {1}]
  %s8 = inlined_call_operand.vmem [shape: f32[2,4,1], index: 8, kind: output, shape index: {2}]
  %9 = xla_tuple %s6, %s7, %s8
  %s10 = sld [smem:[#allocation0]]
  $region81: #{single_stage_forward.2} parent=0
    _
  %s12 = ssub.s32 1, %s10
  %s13 = scalar_select 0, %s12, %s10
  loop: start=0, step=1, limit=4
  $region2: #{single_stage_forward.2} parent=0 // loop_pre_header
    _
  $region3: #{single_stage_forward.2} parent=0 // loop_header
    %s15 = sphi 0, %s19
    %p16 = scmp.ge.s32.totalorder %s15, 4
    %s22 = sphi 0, %s34
    %s23 = sphi 0, %s30
    %s24 = sphi 0, %s22
    %s25 = sphi 0, %s23
    %s26 = sphi 0, %s24
    %s27 = sphi 0, %s25
    %s39 = sphi 0, %s41
    %s42 = sphi 0, %s39
    %s43 = sphi 0, %s42
    %s59 = sphi 0, %s43
    %s63 = sphi 0, %s63
    %s65 = sphi 0, %s63
    %s66 = sphi 0, %s65
    %s80 = sphi 0, %s66
    %s84 = sphi 0, %s84
    %s86 = sphi 0, %s84
    %s87 = sphi 0, %s86
    %s101 = sphi 0, %s87
    %s105 = sphi 0, %s105
    %s107 = sphi 0, %s105
    %s108 = sphi 0, %s107
    %s122 = sphi 0, %s108
    %s126 = sphi 0, %s126
    %s128 = sphi 0, %s126
    %s129 = sphi 0, %s128
    %s143 = sphi 0, %s129
    %s147 = sphi 0, %s147
    %s149 = sphi 0, %s147
    %s150 = sphi 0, %s149
    %s164 = sphi 0, %s150
    %s172 = sphi 0, %s174
    %s175 = sphi 0, %s172
    %s176 = sphi 0, %s175
    %s192 = sphi 0, %s176
    %s198 = sphi 0, %s200
    %s201 = sphi 0, %s198
    %s202 = sphi 0, %s201
    %s218 = sphi 0, %s202
    %s224 = sphi 0, %s226
    %s227 = sphi 0, %s224
    %s228 = sphi 0, %s227
    %s244 = sphi 0, %s228
  $region4: #{single_stage_forward.2} parent=0 // loop_header_branch
    %18 = sbr.rel (%p16) target = $region8
  $region5: #{single_stage_forward.2} parent=0 // loop_body
    %s20 = ssub.s32 %s15, 1
    %s21 = ssub.s32 %s15, 2
    %s28 = sadd.s32 1, %s23
    %p29 = scmp.ge.s32.totalorder %s28, 1
    %s30 = scalar_select %p29, 0, %s28
    %s31 = sadd.s32 1, %s22
    %s32 = scalar_select %p29, %s31, %s22
    %p33 = scmp.ge.s32.totalorder %s32, 2
    %s34 = scalar_select %p33, 0, %s32
    %s35 = ssub.s32 %s22, %s34
    %s36 = ssub.s32 %s23, %s30
    %s37 = sor.u32 %s35, %s36
    %p38 = scmp.eq.s32.totalorder %s37, 0
    %s40 = sadd.s32 %s39, 1
    %s41 = scalar_select %p38, %s39, %s40
    %p44 = pneg %p38
    %p45 = scmp.eq.s32.totalorder %s15, 1
    %p46 = por %p44, %p45
    %p47 = scmp.ne.s32.totalorder %s39, %s42
    %p48 = scmp.eq.s32.totalorder %s15, 0
    %p49 = por %p47, %p48
    %p50 = scmp.ne.s32.totalorder %s39, %s42
    %p51 = scmp.eq.s32.totalorder %s20, 1
    %p52 = por %p50, %p51
    %p53 = scmp.ne.s32.totalorder %s42, %s43
    %p54 = scmp.eq.s32.totalorder %s20, 0
    %p55 = por %p53, %p54
    %p56 = scmp.ne.s32.totalorder %s42, %s43
    %p57 = scmp.eq.s32.totalorder %s21, 1
    %p58 = por %p56, %p57
    %p60 = scmp.ne.s32.totalorder %s43, %s59
    %p61 = scmp.eq.s32.totalorder %s21, 0
    %p62 = por %p60, %p61
    %s64 = sadd.s32 %s63, 1
    %p67 = scmp.eq.s32.totalorder %s15, 1
    %p68 = scmp.ne.s32.totalorder %s63, %s65
    %p69 = scmp.eq.s32.totalorder %s15, 0
    %p70 = por %p68, %p69
    %p71 = scmp.ne.s32.totalorder %s63, %s65
    %p72 = scmp.eq.s32.totalorder %s20, 1
    %p73 = por %p71, %p72
    %p74 = scmp.ne.s32.totalorder %s65, %s66
    %p75 = scmp.eq.s32.totalorder %s20, 0
    %p76 = por %p74, %p75
    %p77 = scmp.ne.s32.totalorder %s65, %s66
    %p78 = scmp.eq.s32.totalorder %s21, 1
    %p79 = por %p77, %p78
    %p81 = scmp.ne.s32.totalorder %s66, %s80
    %p82 = scmp.eq.s32.totalorder %s21, 0
    %p83 = por %p81, %p82
    %s85 = sadd.s32 %s84, 1
    %p88 = scmp.eq.s32.totalorder %s15, 1
    %p89 = scmp.ne.s32.totalorder %s84, %s86
    %p90 = scmp.eq.s32.totalorder %s15, 0
    %p91 = por %p89, %p90
    %p92 = scmp.ne.s32.totalorder %s84, %s86
    %p93 = scmp.eq.s32.totalorder %s20, 1
    %p94 = por %p92, %p93
    %p95 = scmp.ne.s32.totalorder %s86, %s87
    %p96 = scmp.eq.s32.totalorder %s20, 0
    %p97 = por %p95, %p96
    %p98 = scmp.ne.s32.totalorder %s86, %s87
    %p99 = scmp.eq.s32.totalorder %s21, 1
    %p100 = por %p98, %p99
    %p102 = scmp.ne.s32.totalorder %s87, %s101
    %p103 = scmp.eq.s32.totalorder %s21, 0
    %p104 = por %p102, %p103
    %s106 = sadd.s32 %s105, 1
    %p109 = scmp.eq.s32.totalorder %s15, 1
    %p110 = scmp.ne.s32.totalorder %s105, %s107
    %p111 = scmp.eq.s32.totalorder %s15, 0
    %p112 = por %p110, %p111
    %p113 = scmp.ne.s32.totalorder %s105, %s107
    %p114 = scmp.eq.s32.totalorder %s20, 1
    %p115 = por %p113, %p114
    %p116 = scmp.ne.s32.totalorder %s107, %s108
    %p117 = scmp.eq.s32.totalorder %s20, 0
    %p118 = por %p116, %p117
    %p119 = scmp.ne.s32.totalorder %s107, %s108
    %p120 = scmp.eq.s32.totalorder %s21, 1
    %p121 = por %p119, %p120
    %p123 = scmp.ne.s32.totalorder %s108, %s122
    %p124 = scmp.eq.s32.totalorder %s21, 0
    %p125 = por %p123, %p124
    %s127 = sadd.s32 %s126, 1
    %p130 = scmp.eq.s32.totalorder %s15, 1
    %p131 = scmp.ne.s32.totalorder %s126, %s128
    %p132 = scmp.eq.s32.totalorder %s15, 0
    %p133 = por %p131, %p132
    %p134 = scmp.ne.s32.totalorder %s126, %s128
    %p135 = scmp.eq.s32.totalorder %s20, 1
    %p136 = por %p134, %p135
    %p137 = scmp.ne.s32.totalorder %s128, %s129
    %p138 = scmp.eq.s32.totalorder %s20, 0
    %p139 = por %p137, %p138
    %p140 = scmp.ne.s32.totalorder %s128, %s129
    %p141 = scmp.eq.s32.totalorder %s21, 1
    %p142 = por %p140, %p141
    %p144 = scmp.ne.s32.totalorder %s129, %s143
    %p145 = scmp.eq.s32.totalorder %s21, 0
    %p146 = por %p144, %p145
    %s148 = sadd.s32 %s147, 1
    %p151 = scmp.eq.s32.totalorder %s15, 1
    %p152 = scmp.ne.s32.totalorder %s147, %s149
    %p153 = scmp.eq.s32.totalorder %s15, 0
    %p154 = por %p152, %p153
    %p155 = scmp.ne.s32.totalorder %s147, %s149
    %p156 = scmp.eq.s32.totalorder %s20, 1
    %p157 = por %p155, %p156
    %p158 = scmp.ne.s32.totalorder %s149, %s150
    %p159 = scmp.eq.s32.totalorder %s20, 0
    %p160 = por %p158, %p159
    %p161 = scmp.ne.s32.totalorder %s149, %s150
    %p162 = scmp.eq.s32.totalorder %s21, 1
    %p163 = por %p161, %p162
    %p165 = scmp.ne.s32.totalorder %s150, %s164
    %p166 = scmp.eq.s32.totalorder %s21, 0
    %p167 = por %p165, %p166
    %s168 = ssub.s32 %s22, %s34
    %s169 = ssub.s32 %s23, %s30
    %s170 = sor.u32 %s168, %s169
    %p171 = scmp.eq.s32.totalorder %s170, 0
    %s173 = sadd.s32 %s172, 1
    %s174 = scalar_select %p171, %s172, %s173
    %p177 = pneg %p171
    %p178 = scmp.eq.s32.totalorder %s15, 1
    %p179 = por %p177, %p178
    %p180 = scmp.ne.s32.totalorder %s172, %s175
    %p181 = scmp.eq.s32.totalorder %s15, 0
    %p182 = por %p180, %p181
    %p183 = scmp.ne.s32.totalorder %s172, %s175
    %p184 = scmp.eq.s32.totalorder %s20, 1
    %p185 = por %p183, %p184
    %p186 = scmp.ne.s32.totalorder %s175, %s176
    %p187 = scmp.eq.s32.totalorder %s20, 0
    %p188 = por %p186, %p187
    %p189 = scmp.ne.s32.totalorder %s175, %s176
    %p190 = scmp.eq.s32.totalorder %s21, 1
    %p191 = por %p189, %p190
    %p193 = scmp.ne.s32.totalorder %s176, %s192
    %p194 = scmp.eq.s32.totalorder %s21, 0
    %p195 = por %p193, %p194
    %s196 = ssub.s32 %s22, %s34
    %p197 = scmp.eq.s32.totalorder %s196, 0
    %s199 = sadd.s32 %s198, 1
    %s200 = scalar_select %p197, %s198, %s199
    %p203 = pneg %p197
    %p204 = scmp.eq.s32.totalorder %s15, 1
    %p205 = por %p203, %p204
    %p206 = scmp.ne.s32.totalorder %s198, %s201
    %p207 = scmp.eq.s32.totalorder %s15, 0
    %p208 = por %p206, %p207
    %p209 = scmp.ne.s32.totalorder %s198, %s201
    %p210 = scmp.eq.s32.totalorder %s20, 1
    %p211 = por %p209, %p210
    %p212 = scmp.ne.s32.totalorder %s201, %s202
    %p213 = scmp.eq.s32.totalorder %s20, 0
    %p214 = por %p212, %p213
    %p215 = scmp.ne.s32.totalorder %s201, %s202
    %p216 = scmp.eq.s32.totalorder %s21, 1
    %p217 = por %p215, %p216
    %p219 = scmp.ne.s32.totalorder %s202, %s218
    %p220 = scmp.eq.s32.totalorder %s21, 0
    %p221 = por %p219, %p220
    %s222 = ssub.s32 %s22, %s34
    %p223 = scmp.eq.s32.totalorder %s222, 0
    %s225 = sadd.s32 %s224, 1
    %s226 = scalar_select %p223, %s224, %s225
    %p229 = pneg %p223
    %p230 = scmp.eq.s32.totalorder %s15, 1
    %p231 = por %p229, %p230
    %p232 = scmp.ne.s32.totalorder %s224, %s227
    %p233 = scmp.eq.s32.totalorder %s15, 0
    %p234 = por %p232, %p233
    %p235 = scmp.ne.s32.totalorder %s224, %s227
    %p236 = scmp.eq.s32.totalorder %s20, 1
    %p237 = por %p235, %p236
    %p238 = scmp.ne.s32.totalorder %s227, %s228
    %p239 = scmp.eq.s32.totalorder %s20, 0
    %p240 = por %p238, %p239
    %p241 = scmp.ne.s32.totalorder %s227, %s228
    %p242 = scmp.eq.s32.totalorder %s21, 1
    %p243 = por %p241, %p242
    %p245 = scmp.ne.s32.totalorder %s228, %s244
    %p246 = scmp.eq.s32.totalorder %s21, 0
    %p247 = por %p245, %p246
    %p248 = scmp.le.s32.totalorder 1, %s15
    %p249 = scmp.lt.s32.totalorder %s15, 3
    %p250 = pnand %p248, %p249
    %p251 = pneg %p250
    // Predicated region
    $region9: #{single_stage_forward.2} parent=5 // pred_check
      _
    $region10: #{single_stage_forward.2} parent=5 // pred_check_branch
      %253 = sbr.rel (%p250) target = $region12
    $region11: #{single_stage_forward.2} parent=5 // pred_region
      %s254 = ssub.s32 %s15, 1
      // Predicated region
      $region13: #{single_stage_forward.2} parent=11 // pred_check
        %p255 = pneg %p76
      $region14: #{single_stage_forward.2} parent=11 // pred_check_branch
        %257 = sbr.rel (%p255) target = $region16
      $region15: #{single_stage_forward.2} parent=11 // pred_region
        _
      $region16: #{single_stage_forward.2} parent=11 // pred_fallthru
        _
      // Predicated region
      $region17: #{single_stage_forward.2} parent=11 // pred_check
        %p258 = pneg %p97
      $region18: #{single_stage_forward.2} parent=11 // pred_check_branch
        %260 = sbr.rel (%p258) target = $region20
      $region19: #{single_stage_forward.2} parent=11 // pred_region
        _
      $region20: #{single_stage_forward.2} parent=11 // pred_fallthru
        _
      // Predicated region
      $region21: #{single_stage_forward.2} parent=11 // pred_check
        %p261 = pneg %p118
      $region22: #{single_stage_forward.2} parent=11 // pred_check_branch
        %263 = sbr.rel (%p261) target = $region24
      $region23: #{single_stage_forward.2} parent=11 // pred_region
        _
      $region24: #{single_stage_forward.2} parent=11 // pred_fallthru
        _
      // Predicated region
      $region25: #{single_stage_forward.2} parent=11 // pred_check
        %p264 = pneg %p139
      $region26: #{single_stage_forward.2} parent=11 // pred_check_branch
        %266 = sbr.rel (%p264) target = $region28
      $region27: #{single_stage_forward.2} parent=11 // pred_region
        _
      $region28: #{single_stage_forward.2} parent=11 // pred_fallthru
        _
      // Predicated region
      $region29: #{single_stage_forward.2} parent=11 // pred_check
        %p267 = pneg %p160
      $region30: #{single_stage_forward.2} parent=11 // pred_check_branch
        %269 = sbr.rel (%p267) target = $region32
      $region31: #{single_stage_forward.2} parent=11 // pred_region
        _
      $region32: #{single_stage_forward.2} parent=11 // pred_fallthru
        _
    $region12: #{single_stage_forward.2} parent=5 // pred_fallthru
      _
    %p270 = scmp.lt.s32.totalorder %s15, 2
    // Predicated region
    $region33: #{single_stage_forward.2} parent=5 // pred_check
      %p271 = pneg %p270
    $region34: #{single_stage_forward.2} parent=5 // pred_check_branch
      %273 = sbr.rel (%p271) target = $region36
    $region35: #{single_stage_forward.2} parent=5 // pred_region
      // Predicated region
      $region37: #{single_stage_forward.2} parent=35 // pred_check
        %p274 = pneg %p49
      $region38: #{single_stage_forward.2} parent=35 // pred_check_branch
        %276 = sbr.rel (%p274) target = $region40
      $region39: #{single_stage_forward.2} parent=35 // pred_region
        %s277 = smul.u32 2, %s23
        %p278 = scmp.lt.s32.totalorder %s22, 1
        %s279 = scalar_select %p278, %s22, 1
        %p280 = scmp.lt.s32.totalorder %s277, 1
        %s281 = scalar_select %p280, %s277, 1
        %s282 = smul.addr %s279, 2
        %s283 = sadd.s32 %s281, %s282
        %s284 = smul.addr %s283, 4
        %s285 = scalar_lea.vmem %s0, %s284
        %s286 = smul.u32 2, %s23
      $region40: #{single_stage_forward.2} parent=35 // pred_fallthru
        _
    $region36: #{single_stage_forward.2} parent=5 // pred_fallthru
      _
    %p287 = scmp.le.s32.totalorder 1, %s15
    %p288 = scmp.lt.s32.totalorder %s15, 3
    %p289 = pnand %p287, %p288
    %p290 = pneg %p289
    // Predicated region
    $region41: #{single_stage_forward.2} parent=5 // pred_check
      _
    $region42: #{single_stage_forward.2} parent=5 // pred_check_branch
      %292 = sbr.rel (%p289) target = $region44
    $region43: #{single_stage_forward.2} parent=5 // pred_region
      %s293 = ssub.s32 %s15, 1
      %s294 = smul.u32 2, %s25
      %p295 = scmp.lt.s32.totalorder %s24, 1
      %s296 = scalar_select %p295, %s24, 1
      %p297 = scmp.lt.s32.totalorder %s294, 1
      %s298 = scalar_select %p297, %s294, 1
      %s299 = smul.addr %s296, 2
      %s300 = sadd.s32 %s298, %s299
      %s301 = smul.addr %s300, 4
      %s302 = scalar_lea.vmem %s0, %s301
      %p303 = pneg %p55
      %p304 = pneg %p52
      %p305 = pneg %p76
      %p306 = pneg %p73
      %p307 = pneg %p97
      %p308 = pneg %p94
      %p309 = pneg %p118
      %p310 = pneg %p115
      %p311 = pneg %p139
      %p312 = pneg %p136
      %p313 = pneg %p160
      %p314 = pneg %p157
      %p315 = pneg %p188
      %p316 = pneg %p185
      %s317 = smul.u32 2, %s25
      %p318 = scmp.lt.s32.totalorder %s24, 1
      %s319 = scalar_select %p318, %s24, 1
      %p320 = scmp.lt.s32.totalorder %s317, 1
      %s321 = scalar_select %p320, %s317, 1
      %s322 = smul.addr %s319, 2
      %s323 = sadd.s32 %s321, %s322
      %s324 = smul.addr %s323, 4
      %s325 = scalar_lea.vmem %s6, %s324
      %p326 = pneg %p214
      %p327 = pneg %p211
      %p328 = scmp.lt.s32.totalorder %s24, 1
      %s329 = scalar_select %p328, %s24, 1
      %s330 = smul.addr %s329, 4
      %s331 = scalar_lea.vmem %s7, %s330
      %p332 = pneg %p240
      %p333 = pneg %p237
      %p334 = scmp.lt.s32.totalorder %s24, 1
      %s335 = scalar_select %p334, %s24, 1
      %s336 = smul.addr %s335, 4
      %s337 = scalar_lea.vmem %s8, %s336
      %s338 = smul.u32 2, %s25
      %p339 = scmp.lt.s32.totalorder %s24, 1
      %s340 = scalar_select %p339, %s24, 1
      %p341 = scmp.lt.s32.totalorder %s338, 1
      %s342 = scalar_select %p341, %s338, 1
      %s343 = smul.addr %s340, 2
      %s344 = sadd.s32 %s342, %s343
      %s345 = smul.addr %s344, 4
      %s346 = scalar_lea.vmem %s0, %s345
      %s347 = smul.u32 2, %s25
      %s348 = smul.u32 2, %s25
      %p349 = scmp.lt.s32.totalorder %s24, 1
      %s350 = scalar_select %p349, %s24, 1
      %p351 = scmp.lt.s32.totalorder %s348, 1
      %s352 = scalar_select %p351, %s348, 1
      %s353 = smul.addr %s350, 2
      %s354 = sadd.s32 %s352, %s353
      %s355 = smul.addr %s354, 4
      %s356 = scalar_lea.vmem %s6, %s355
      %s357 = smul.u32 2, %s25
      %p358 = scmp.lt.s32.totalorder %s24, 1
      %s359 = scalar_select %p358, %s24, 1
      %s360 = smul.addr %s359, 4
      %s361 = scalar_lea.vmem %s7, %s360
      %p362 = scmp.lt.s32.totalorder %s24, 1
      %s363 = scalar_select %p362, %s24, 1
      %s364 = smul.addr %s363, 4
      %s365 = scalar_lea.vmem %s8, %s364
      %p366 = scmp.eq.s32.totalorder %s25, 0
      // Predicated region
      $region45: #{single_stage_forward.2} parent=43 // pred_check
        %p367 = pneg %p366
      $region46: #{single_stage_forward.2} parent=43 // pred_check_branch
        %369 = sbr.rel (%p367) target = $region48
      $region47: #{single_stage_forward.2} parent=43 // pred_region
        %vm370 = vcmask 3072
        %371 = vst.msk [vmem:[%s361] sm:$0xf] %vm370, 0.0
        %372 = vst.msk [vmem:[%s365] sm:$0xf] %vm370, 0.0
      $region48: #{single_stage_forward.2} parent=43 // pred_fallthru
        _
      %v373 = vld [vmem:[%s346] sm:$0xff]
      %v374 = vld [vmem:[%s2] sm:$0xff]
      %v375 = vld [vmem:[%s2 + $0x8] sm:$0xff]
      %v376 = vld [vmem:[%s2 + $0x10] sm:$0xff]
      %v377 = vld [vmem:[%s2 + $0x18] sm:$0xff]
      %379 = vset.pattern.permute.xlu0 0
      %380 = vperm.xlu0 %379, %v374
      %v381 = vpop.permute.xlu0 %380
      %384 = vset.pattern.permute.xlu0 0
      %385 = vperm.xlu0 %384, %v375
      %v386 = vpop.permute.xlu0 %385
      %389 = vset.pattern.permute.xlu0 0
      %390 = vperm.xlu0 %389, %v376
      %v391 = vpop.permute.xlu0 %390
      %394 = vset.pattern.permute.xlu0 0
      %395 = vperm.xlu0 %394, %v377
      %v396 = vpop.permute.xlu0 %395
      %v398 = vld [vmem:[%s1] sm:$0xff]
      %v399 = vld [vmem:[%s1 + $0x8] sm:$0xff]
      %v400 = vld [vmem:[%s1 + $0x10] sm:$0xff]
      %v401 = vld [vmem:[%s1 + $0x18] sm:$0xff]
      %403 = vset.pattern.permute.xlu0 0
      %404 = vperm.xlu0 %403, %v398
      %v405 = vpop.permute.xlu0 %404
      %408 = vset.pattern.permute.xlu0 0
      %409 = vperm.xlu0 %408, %v399
      %v410 = vpop.permute.xlu0 %409
      %413 = vset.pattern.permute.xlu0 0
      %414 = vperm.xlu0 %413, %v400
      %v415 = vpop.permute.xlu0 %414
      %418 = vset.pattern.permute.xlu0 0
      %419 = vperm.xlu0 %418, %v401
      %v420 = vpop.permute.xlu0 %419
      %v423 = vlaneseq
      %v424 = vshrl.u32 %v423, 7
      %v425 = vsub.s32 0, %v424
      %v426 = vrot.slane %v373, %v425
      %v427 = vlaneseq
      %v428 = vshrl.u32 %v427, 7
      %v429 = vsub.s32 4, %v428
      %v430 = vrot.slane %v373, %v429
      %v433 = vlaneseq
      %v434 = vshrl.u32 %v433, 7
      %v435 = vsub.s32 0, %v434
      %v436 = vrot.slane %v426, %v435
      %v437 = vlaneseq
      %v438 = vshrl.u32 %v437, 7
      %v439 = vsub.s32 0, %v438
      %v440 = vrot.slane %v430, %v439
      %v441 = vmul.f32 %v405, %v436
      %v442 = vmul.f32 %v405, %v440
      %v443 = vmul.f32 %v410, %v436
      %v444 = vmul.f32 %v410, %v440
      %v445 = vmul.f32 %v415, %v436
      %v446 = vmul.f32 %v415, %v440
      %v447 = vmul.f32 %v420, %v436
      %v448 = vmul.f32 %v420, %v440
      %v449 = vadd.f32 %v381, %v441
      %v450 = vadd.f32 %v381, %v442
      %v451 = vadd.f32 %v386, %v443
      %v452 = vadd.f32 %v386, %v444
      %v453 = vadd.f32 %v391, %v445
      %v454 = vadd.f32 %v391, %v446
      %v455 = vadd.f32 %v396, %v447
      %v456 = vadd.f32 %v396, %v448
      %457 = vset.pattern.permute.xlu0 1
      %458 = vperm.xlu0 %457, %v398
      %v459 = vpop.permute.xlu0 %458
      %461 = vset.pattern.permute.xlu0 1
      %462 = vperm.xlu0 %461, %v399
      %v463 = vpop.permute.xlu0 %462
      %465 = vset.pattern.permute.xlu0 1
      %466 = vperm.xlu0 %465, %v400
      %v467 = vpop.permute.xlu0 %466
      %469 = vset.pattern.permute.xlu0 1
      %470 = vperm.xlu0 %469, %v401
      %v471 = vpop.permute.xlu0 %470
      %v473 = vlaneseq
      %v474 = vshrl.u32 %v473, 7
      %v475 = vsub.s32 1, %v474
      %v476 = vrot.slane %v373, %v475
      %v477 = vlaneseq
      %v478 = vshrl.u32 %v477, 7
      %v479 = vsub.s32 5, %v478
      %v480 = vrot.slane %v373, %v479
      %v483 = vlaneseq
      %v484 = vshrl.u32 %v483, 7
      %v485 = vsub.s32 1, %v484
      %v486 = vrot.slane %v476, %v485
      %v487 = vlaneseq
      %v488 = vshrl.u32 %v487, 7
      %v489 = vsub.s32 1, %v488
      %v490 = vrot.slane %v480, %v489
      %v491 = vmul.f32 %v459, %v486
      %v492 = vmul.f32 %v459, %v490
      %v493 = vmul.f32 %v463, %v486
      %v494 = vmul.f32 %v463, %v490
      %v495 = vmul.f32 %v467, %v486
      %v496 = vmul.f32 %v467, %v490
      %v497 = vmul.f32 %v471, %v486
      %v498 = vmul.f32 %v471, %v490
      %v499 = vadd.f32 %v449, %v491
      %v500 = vadd.f32 %v450, %v492
      %v501 = vadd.f32 %v451, %v493
      %v502 = vadd.f32 %v452, %v494
      %v503 = vadd.f32 %v453, %v495
      %v504 = vadd.f32 %v454, %v496
      %v505 = vadd.f32 %v455, %v497
      %v506 = vadd.f32 %v456, %v498
      %507 = vset.pattern.permute.xlu0 2
      %508 = vperm.xlu0 %507, %v398
      %v509 = vpop.permute.xlu0 %508
      %511 = vset.pattern.permute.xlu0 2
      %512 = vperm.xlu0 %511, %v399
      %v513 = vpop.permute.xlu0 %512
      %515 = vset.pattern.permute.xlu0 2
      %516 = vperm.xlu0 %515, %v400
      %v517 = vpop.permute.xlu0 %516
      %519 = vset.pattern.permute.xlu0 2
      %520 = vperm.xlu0 %519, %v401
      %v521 = vpop.permute.xlu0 %520
      %v523 = vlaneseq
      %v524 = vshrl.u32 %v523, 7
      %v525 = vsub.s32 2, %v524
      %v526 = vrot.slane %v373, %v525
      %v527 = vlaneseq
      %v528 = vshrl.u32 %v527, 7
      %v529 = vsub.s32 6, %v528
      %v530 = vrot.slane %v373, %v529
      %v533 = vlaneseq
      %v534 = vshrl.u32 %v533, 7
      %v535 = vsub.s32 2, %v534
      %v536 = vrot.slane %v526, %v535
      %v537 = vlaneseq
      %v538 = vshrl.u32 %v537, 7
      %v539 = vsub.s32 2, %v538
      %v540 = vrot.slane %v530, %v539
      %v541 = vmul.f32 %v509, %v536
      %v542 = vmul.f32 %v509, %v540
      %v543 = vmul.f32 %v513, %v536
      %v544 = vmul.f32 %v513, %v540
      %v545 = vmul.f32 %v517, %v536
      %v546 = vmul.f32 %v517, %v540
      %v547 = vmul.f32 %v521, %v536
      %v548 = vmul.f32 %v521, %v540
      %v549 = vadd.f32 %v499, %v541
      %v550 = vadd.f32 %v500, %v542
      %v551 = vadd.f32 %v501, %v543
      %v552 = vadd.f32 %v502, %v544
      %v553 = vadd.f32 %v503, %v545
      %v554 = vadd.f32 %v504, %v546
      %v555 = vadd.f32 %v505, %v547
      %v556 = vadd.f32 %v506, %v548
      %557 = vset.pattern.permute.xlu0 3
      %558 = vperm.xlu0 %557, %v398
      %v559 = vpop.permute.xlu0 %558
      %561 = vset.pattern.permute.xlu0 3
      %562 = vperm.xlu0 %561, %v399
      %v563 = vpop.permute.xlu0 %562
      %565 = vset.pattern.permute.xlu0 3
      %566 = vperm.xlu0 %565, %v400
      %v567 = vpop.permute.xlu0 %566
      %569 = vset.pattern.permute.xlu0 3
      %570 = vperm.xlu0 %569, %v401
      %v571 = vpop.permute.xlu0 %570
      %v573 = vlaneseq
      %v574 = vshrl.u32 %v573, 7
      %v575 = vsub.s32 3, %v574
      %v576 = vrot.slane %v373, %v575
      %v577 = vlaneseq
      %v578 = vshrl.u32 %v577, 7
      %v579 = vsub.s32 7, %v578
      %v580 = vrot.slane %v373, %v579
      %v583 = vlaneseq
      %v584 = vshrl.u32 %v583, 7
      %v585 = vsub.s32 3, %v584
      %v586 = vrot.slane %v576, %v585
      %v587 = vlaneseq
      %v588 = vshrl.u32 %v587, 7
      %v589 = vsub.s32 3, %v588
      %v590 = vrot.slane %v580, %v589
      %v591 = vmul.f32 %v559, %v586
      %v592 = vmul.f32 %v559, %v590
      %v593 = vmul.f32 %v563, %v586
      %v594 = vmul.f32 %v563, %v590
      %v595 = vmul.f32 %v567, %v586
      %v596 = vmul.f32 %v567, %v590
      %v597 = vmul.f32 %v571, %v586
      %v598 = vmul.f32 %v571, %v590
      %v599 = vadd.f32 %v549, %v591
      %v600 = vadd.f32 %v550, %v592
      %v601 = vadd.f32 %v551, %v593
      %v602 = vadd.f32 %v552, %v594
      %v603 = vadd.f32 %v553, %v595
      %v604 = vadd.f32 %v554, %v596
      %v605 = vadd.f32 %v555, %v597
      %v606 = vadd.f32 %v556, %v598
      %v607 = vmax.f32 %v599, 0.0
      %v608 = vmax.f32 %v600, 0.0
      %v609 = vmax.f32 %v601, 0.0
      %v610 = vmax.f32 %v602, 0.0
      %v611 = vmax.f32 %v603, 0.0
      %v612 = vmax.f32 %v604, 0.0
      %v613 = vmax.f32 %v605, 0.0
      %v614 = vmax.f32 %v606, 0.0
      %v615 = vld [vmem:[%s3] sm:$0xff]
      %vm616 = vcmask 261120
      %v618 = vsel %vm616, %v615, 0
      %620 = vmatprep.subr.mxu0 0.0
      %621 = vmatpush1.msra.mxu0 0.0
      %622 = vmatprep.subr.mxu0 0.0
      %623 = vmatpush1.msra.mxu0 0.0
      %624 = vmatprep.subr.mxu0 0.0
      %625 = vmatpush1.msra.mxu0 0.0
      %626 = vmatprep.subr.mxu0 0.0
      %627 = vmatpush1.msra.mxu0 0.0
      %628 = vmatprep.subr.mxu0 0.0
      %629 = vmatpush1.msra.mxu0 0.0
      %630 = vmatprep.subr.mxu0 0.0
      %631 = vmatpush1.msra.mxu0 0.0
      %632 = vmatprep.subr.mxu0 0.0
      %633 = vmatpush1.msra.mxu0 0.0
      %634 = vmatprep.subr.mxu0 0.0
      %635 = vmatpush1.msra.mxu0 0.0
      %636 = vmatprep.subr.mxu0 0.0
      %637 = vmatpush1.msra.mxu0 0.0
      %638 = vmatprep.subr.mxu0 0.0
      %639 = vmatpush1.msra.mxu0 0.0
      %640 = vmatprep.subr.mxu0 0.0
      %641 = vmatpush1.msra.mxu0 0.0
      %642 = vmatprep.subr.mxu0 0.0
      %643 = vmatpush1.msra.mxu0 0.0
      %644 = vmatprep.subr.mxu0 %v614
      %645 = vmatpush1.msra.mxu0 %v613
      %646 = vmatprep.subr.mxu0 %v612
      %647 = vmatpush1.msra.mxu0 %v611
      %648 = vmatprep.subr.mxu0 %v610
      %649 = vmatpush1.msra.mxu0 %v609
      %650 = vmatprep.subr.mxu0 %v608
      %651 = vmatpush1.msra.mxu0 %v607
      %652 = vmatprep.subr.mxu0 0.0
      %653 = vmatpush2.msra.mxu0 0.0
      %654 = vmatprep.subr.mxu0 0.0
      %655 = vmatpush2.msra.mxu0 0.0
      %656 = vmatprep.subr.mxu0 0.0
      %657 = vmatpush2.msra.mxu0 0.0
      %658 = vmatprep.subr.mxu0 0.0
      %659 = vmatpush2.msra.mxu0 0.0
      %660 = vmatprep.subr.mxu0 0.0
      %661 = vmatpush2.msra.mxu0 0.0
      %662 = vmatprep.subr.mxu0 0.0
      %663 = vmatpush2.msra.mxu0 0.0
      %664 = vmatprep.subr.mxu0 0.0
      %665 = vmatpush2.msra.mxu0 0.0
      %666 = vmatprep.subr.mxu0 0.0
      %667 = vmatpush2.msra.mxu0 0.0
      %668 = vmatprep.subr.mxu0 0.0
      %669 = vmatpush2.msra.mxu0 0.0
      %670 = vmatprep.subr.mxu0 0.0
      %671 = vmatpush2.msra.mxu0 0.0
      %672 = vmatprep.subr.mxu0 0.0
      %673 = vmatpush2.msra.mxu0 0.0
      %674 = vmatprep.subr.mxu0 0.0
      %675 = vmatpush2.msra.mxu0 0.0
      %676 = vmatprep.subr.mxu0 0.0
      %677 = vmatpush2.msra.mxu0 0.0
      %678 = vmatprep.subr.mxu0 0.0
      %679 = vmatpush2.msra.mxu0 0.0
      %680 = vmatprep.subr.mxu0 0.0
      %681 = vmatpush2.msra.mxu0 0.0
      %682 = vmatprep.subr.mxu0 0.0
      %683 = vmatpush2.msra.mxu0 0.0
      %684 = vmatprep.mubr.f32.mxu0 0.0
      %685 = vmatmul.mubr.f32.gmra.mxu0 %v618
      %v686 = vpop.f32.mrf.mxu0
      %v687 = vadd.f32 0.0, %v686
      %v688 = vpop.f32.mrf.mxu0
      %v689 = vadd.f32 0.0, %v688
      %690 = vdwg.mxu0
      %v691 = vld [vmem:[%s5] sm:$0xf]
      %693 = vset.pattern.permute.xlu0 0
      %694 = vperm.xlu0 %693, %v691
      %v695 = vpop.permute.xlu0 %694
      %v696 = vrot.slane %v695, 4
      %v698 = vadd.f32 %v687, %v696
      %v699 = vadd.f32 %v689, %v696
      %v702 = vcombine.high %v698, %v699
      %704 = vst [vmem:[%s356] sm:$0xff] %v702
      %v705 = vld [vmem:[%s361] sm:$0xf]
      %vm706 = vcmask 1043456
      %v707 = vsel %vm706, %v687, 0.0
      %v708 = vsel %vm706, %v689, 0.0
      %v709 = vadd.f32 %v707, %v708
      %710 = vadd.xlane.f32.xlu0 %v709
      %v711 = vpop.xlane.xlu0 %710
      %v712 = vadd.f32 %v705, %v711
      %vm713 = vcmask 3072
      %714 = vst.msk [vmem:[%s361] sm:$0xf] %vm713, %v712
      %v715 = vmax.f32 %v687, 0.0
      %v716 = vmax.f32 %v689, 0.0
      %v717 = vld [vmem:[%s365] sm:$0xf]
      %v718 = vsel %vm706, %v715, -inf
      %v719 = vsel %vm706, %v716, -inf
      %v720 = vmax.f32 %v718, %v719
      %721 = vmax.xlane.f32.xlu0 %v720
      %v722 = vpop.xlane.xlu0 %721
      %v723 = vmax.f32 %v717, %v722
      %724 = vst.msk [vmem:[%s365] sm:$0xf] %vm713, %v723
      // Predicated region
      $region49: #{single_stage_forward.2} parent=43 // pred_check
        %p725 = pneg %p366
      $region50: #{single_stage_forward.2} parent=43 // pred_check_branch
        %727 = sbr.rel (%p725) target = $region52
      $region51: #{single_stage_forward.2} parent=43 // pred_region
        %v728 = vld [vmem:[%s361] sm:$0xf]
        %v729 = vmul.f32 %v728, 0.00390625
        %v730 = vld [vmem:[%s4] sm:$0xf]
        %v731 = vadd.f32 %v729, %v730
        %732 = vst.msk [vmem:[%s361] sm:$0xf] %vm713, %v731
      $region52: #{single_stage_forward.2} parent=43 // pred_fallthru
        _
      %s733 = smul.u32 2, %s25
      %p734 = scmp.lt.s32.totalorder %s24, 1
      %s735 = scalar_select %p734, %s24, 1
      %p736 = scmp.lt.s32.totalorder %s733, 1
      %s737 = scalar_select %p736, %s733, 1
      %s738 = smul.addr %s735, 2
      %s739 = sadd.s32 %s737, %s738
      %s740 = smul.addr %s739, 4
      %s741 = scalar_lea.vmem %s6, %s740
      %p742 = scmp.lt.s32.totalorder %s24, 1
      %s743 = scalar_select %p742, %s24, 1
      %s744 = smul.addr %s743, 4
      %s745 = scalar_lea.vmem %s7, %s744
      %p746 = scmp.lt.s32.totalorder %s24, 1
      %s747 = scalar_select %p746, %s24, 1
      %s748 = smul.addr %s747, 4
      %s749 = scalar_lea.vmem %s8, %s748
      // Predicated region
      $region53: #{single_stage_forward.2} parent=43 // pred_check
        %p750 = pneg %p185
      $region54: #{single_stage_forward.2} parent=43 // pred_check_branch
        %752 = sbr.rel (%p750) target = $region56
      $region55: #{single_stage_forward.2} parent=43 // pred_region
        %s753 = smul.u32 2, %s25
      $region56: #{single_stage_forward.2} parent=43 // pred_fallthru
        _
      // Predicated region
      $region57: #{single_stage_forward.2} parent=43 // pred_check
        %p754 = pneg %p211
      $region58: #{single_stage_forward.2} parent=43 // pred_check_branch
        %756 = sbr.rel (%p754) target = $region60
      $region59: #{single_stage_forward.2} parent=43 // pred_region
        _
      $region60: #{single_stage_forward.2} parent=43 // pred_fallthru
        _
      // Predicated region
      $region61: #{single_stage_forward.2} parent=43 // pred_check
        %p757 = pneg %p237
      $region62: #{single_stage_forward.2} parent=43 // pred_check_branch
        %759 = sbr.rel (%p757) target = $region64
      $region63: #{single_stage_forward.2} parent=43 // pred_region
        _
      $region64: #{single_stage_forward.2} parent=43 // pred_fallthru
        _
    $region44: #{single_stage_forward.2} parent=5 // pred_fallthru
      _
    %p760 = scmp.le.s32.totalorder 2, %s15
    // Predicated region
    $region65: #{single_stage_forward.2} parent=5 // pred_check
      %p761 = pneg %p760
    $region66: #{single_stage_forward.2} parent=5 // pred_check_branch
      %763 = sbr.rel (%p761) target = $region68
    $region67: #{single_stage_forward.2} parent=5 // pred_region
      %s764 = ssub.s32 %s15, 2
      // Predicated region
      $region69: #{single_stage_forward.2} parent=67 // pred_check
        %p765 = pneg %p191
      $region70: #{single_stage_forward.2} parent=67 // pred_check_branch
        %767 = sbr.rel (%p765) target = $region72
      $region71: #{single_stage_forward.2} parent=67 // pred_region
        %s768 = smul.u32 2, %s27
        %p769 = scmp.lt.s32.totalorder %s26, 1
        %s770 = scalar_select %p769, %s26, 1
        %p771 = scmp.lt.s32.totalorder %s768, 1
        %s772 = scalar_select %p771, %s768, 1
        %s773 = smul.addr %s770, 2
        %s774 = sadd.s32 %s772, %s773
        %s775 = smul.addr %s774, 4
        %s776 = scalar_lea.vmem %s6, %s775
      $region72: #{single_stage_forward.2} parent=67 // pred_fallthru
        _
      // Predicated region
      $region73: #{single_stage_forward.2} parent=67 // pred_check
        %p777 = pneg %p217
      $region74: #{single_stage_forward.2} parent=67 // pred_check_branch
        %779 = sbr.rel (%p777) target = $region76
      $region75: #{single_stage_forward.2} parent=67 // pred_region
        %p780 = scmp.lt.s32.totalorder %s26, 1
        %s781 = scalar_select %p780, %s26, 1
        %s782 = smul.addr %s781, 4
        %s783 = scalar_lea.vmem %s7, %s782
      $region76: #{single_stage_forward.2} parent=67 // pred_fallthru
        _
      // Predicated region
      $region77: #{single_stage_forward.2} parent=67 // pred_check
        %p784 = pneg %p243
      $region78: #{single_stage_forward.2} parent=67 // pred_check_branch
        %786 = sbr.rel (%p784) target = $region80
      $region79: #{single_stage_forward.2} parent=67 // pred_region
        %p787 = scmp.lt.s32.totalorder %s26, 1
        %s788 = scalar_select %p787, %s26, 1
        %s789 = smul.addr %s788, 4
        %s790 = scalar_lea.vmem %s8, %s789
      $region80: #{single_stage_forward.2} parent=67 // pred_fallthru
        _
    $region68: #{single_stage_forward.2} parent=5 // pred_fallthru
      _
  $region6: #{single_stage_forward.2} parent=0 // loop_footer
    %s19 = sadd.s32 1, %s15
  $region7: #{single_stage_forward.2} parent=0 // loop_footer_branch
    %14 = sbr.rel target = $region3
  $region8: #{single_stage_forward.2} parent=0 // loop_exit
    _

// kernel: single_stage_forward.3
$region0: #{single_stage_forward.3}
  #allocation0 [shape = 'u32[]', space=smem, size = 0x4, offset = 0x4, fixed_abs, tag = 'smem constant byte address 0x4 - core index']
  #allocation1 [shape = 'u32[144,128]{1,0:T(1,128)}', space=vmem, size = 0x12000, scoped, tag = 'internal scratch']
  %s0 = inlined_call_operand.vmem [shape: f32[2,4,256], index: 0, kind: input, shape index: {}]
  %s1 = inlined_call_operand.vmem [shape: f32[32,4], index: 1, kind: input, shape index: {}]
  %s2 = inlined_call_operand.vmem [shape: f32[32,1], index: 2, kind: input, shape index: {}]
  %s3 = inlined_call_operand.vmem [shape: f32[4,32], index: 3, kind: input, shape index: {}]
  %s4 = inlined_call_operand.vmem [shape: f32[2,4,1], index: 4, kind: input, shape index: {}]
  %s5 = inlined_call_operand.vmem [shape: s32[2,1,256], index: 5, kind: output, shape index: {}]
  %s6 = sld [smem:[#allocation0]]
  $region53: #{single_stage_forward.3} parent=0
    _
  %s8 = ssub.s32 1, %s6
  %s9 = scalar_select 0, %s8, %s6
  loop: start=0, step=1, limit=4
  $region2: #{single_stage_forward.3} parent=0 // loop_pre_header
    _
  $region3: #{single_stage_forward.3} parent=0 // loop_header
    %s11 = sphi 0, %s15
    %p12 = scmp.ge.s32.totalorder %s11, 4
    %s18 = sphi 0, %s30
    %s19 = sphi 0, %s26
    %s20 = sphi 0, %s18
    %s21 = sphi 0, %s19
    %s22 = sphi 0, %s20
    %s23 = sphi 0, %s21
    %s35 = sphi 0, %s37
    %s38 = sphi 0, %s35
    %s39 = sphi 0, %s38
    %s55 = sphi 0, %s39
    %s59 = sphi 0, %s59
    %s61 = sphi 0, %s59
    %s62 = sphi 0, %s61
    %s76 = sphi 0, %s62
    %s80 = sphi 0, %s80
    %s82 = sphi 0, %s80
    %s83 = sphi 0, %s82
    %s97 = sphi 0, %s83
    %s101 = sphi 0, %s101
    %s103 = sphi 0, %s101
    %s104 = sphi 0, %s103
    %s118 = sphi 0, %s104
    %s124 = sphi 0, %s126
    %s127 = sphi 0, %s124
    %s128 = sphi 0, %s127
    %s144 = sphi 0, %s128
    %s152 = sphi 0, %s154
    %s155 = sphi 0, %s152
    %s156 = sphi 0, %s155
    %s172 = sphi 0, %s156
  $region4: #{single_stage_forward.3} parent=0 // loop_header_branch
    %14 = sbr.rel (%p12) target = $region8
  $region5: #{single_stage_forward.3} parent=0 // loop_body
    %s16 = ssub.s32 %s11, 1
    %s17 = ssub.s32 %s11, 2
    %s24 = sadd.s32 1, %s19
    %p25 = scmp.ge.s32.totalorder %s24, 1
    %s26 = scalar_select %p25, 0, %s24
    %s27 = sadd.s32 1, %s18
    %s28 = scalar_select %p25, %s27, %s18
    %p29 = scmp.ge.s32.totalorder %s28, 2
    %s30 = scalar_select %p29, 0, %s28
    %s31 = ssub.s32 %s18, %s30
    %s32 = ssub.s32 %s19, %s26
    %s33 = sor.u32 %s31, %s32
    %p34 = scmp.eq.s32.totalorder %s33, 0
    %s36 = sadd.s32 %s35, 1
    %s37 = scalar_select %p34, %s35, %s36
    %p40 = pneg %p34
    %p41 = scmp.eq.s32.totalorder %s11, 1
    %p42 = por %p40, %p41
    %p43 = scmp.ne.s32.totalorder %s35, %s38
    %p44 = scmp.eq.s32.totalorder %s11, 0
    %p45 = por %p43, %p44
    %p46 = scmp.ne.s32.totalorder %s35, %s38
    %p47 = scmp.eq.s32.totalorder %s16, 1
    %p48 = por %p46, %p47
    %p49 = scmp.ne.s32.totalorder %s38, %s39
    %p50 = scmp.eq.s32.totalorder %s16, 0
    %p51 = por %p49, %p50
    %p52 = scmp.ne.s32.totalorder %s38, %s39
    %p53 = scmp.eq.s32.totalorder %s17, 1
    %p54 = por %p52, %p53
    %p56 = scmp.ne.s32.totalorder %s39, %s55
    %p57 = scmp.eq.s32.totalorder %s17, 0
    %p58 = por %p56, %p57
    %s60 = sadd.s32 %s59, 1
    %p63 = scmp.eq.s32.totalorder %s11, 1
    %p64 = scmp.ne.s32.totalorder %s59, %s61
    %p65 = scmp.eq.s32.totalorder %s11, 0
    %p66 = por %p64, %p65
    %p67 = scmp.ne.s32.totalorder %s59, %s61
    %p68 = scmp.eq.s32.totalorder %s16, 1
    %p69 = por %p67, %p68
    %p70 = scmp.ne.s32.totalorder %s61, %s62
    %p71 = scmp.eq.s32.totalorder %s16, 0
    %p72 = por %p70, %p71
    %p73 = scmp.ne.s32.totalorder %s61, %s62
    %p74 = scmp.eq.s32.totalorder %s17, 1
    %p75 = por %p73, %p74
    %p77 = scmp.ne.s32.totalorder %s62, %s76
    %p78 = scmp.eq.s32.totalorder %s17, 0
    %p79 = por %p77, %p78
    %s81 = sadd.s32 %s80, 1
    %p84 = scmp.eq.s32.totalorder %s11, 1
    %p85 = scmp.ne.s32.totalorder %s80, %s82
    %p86 = scmp.eq.s32.totalorder %s11, 0
    %p87 = por %p85, %p86
    %p88 = scmp.ne.s32.totalorder %s80, %s82
    %p89 = scmp.eq.s32.totalorder %s16, 1
    %p90 = por %p88, %p89
    %p91 = scmp.ne.s32.totalorder %s82, %s83
    %p92 = scmp.eq.s32.totalorder %s16, 0
    %p93 = por %p91, %p92
    %p94 = scmp.ne.s32.totalorder %s82, %s83
    %p95 = scmp.eq.s32.totalorder %s17, 1
    %p96 = por %p94, %p95
    %p98 = scmp.ne.s32.totalorder %s83, %s97
    %p99 = scmp.eq.s32.totalorder %s17, 0
    %p100 = por %p98, %p99
    %s102 = sadd.s32 %s101, 1
    %p105 = scmp.eq.s32.totalorder %s11, 1
    %p106 = scmp.ne.s32.totalorder %s101, %s103
    %p107 = scmp.eq.s32.totalorder %s11, 0
    %p108 = por %p106, %p107
    %p109 = scmp.ne.s32.totalorder %s101, %s103
    %p110 = scmp.eq.s32.totalorder %s16, 1
    %p111 = por %p109, %p110
    %p112 = scmp.ne.s32.totalorder %s103, %s104
    %p113 = scmp.eq.s32.totalorder %s16, 0
    %p114 = por %p112, %p113
    %p115 = scmp.ne.s32.totalorder %s103, %s104
    %p116 = scmp.eq.s32.totalorder %s17, 1
    %p117 = por %p115, %p116
    %p119 = scmp.ne.s32.totalorder %s104, %s118
    %p120 = scmp.eq.s32.totalorder %s17, 0
    %p121 = por %p119, %p120
    %s122 = ssub.s32 %s18, %s30
    %p123 = scmp.eq.s32.totalorder %s122, 0
    %s125 = sadd.s32 %s124, 1
    %s126 = scalar_select %p123, %s124, %s125
    %p129 = pneg %p123
    %p130 = scmp.eq.s32.totalorder %s11, 1
    %p131 = por %p129, %p130
    %p132 = scmp.ne.s32.totalorder %s124, %s127
    %p133 = scmp.eq.s32.totalorder %s11, 0
    %p134 = por %p132, %p133
    %p135 = scmp.ne.s32.totalorder %s124, %s127
    %p136 = scmp.eq.s32.totalorder %s16, 1
    %p137 = por %p135, %p136
    %p138 = scmp.ne.s32.totalorder %s127, %s128
    %p139 = scmp.eq.s32.totalorder %s16, 0
    %p140 = por %p138, %p139
    %p141 = scmp.ne.s32.totalorder %s127, %s128
    %p142 = scmp.eq.s32.totalorder %s17, 1
    %p143 = por %p141, %p142
    %p145 = scmp.ne.s32.totalorder %s128, %s144
    %p146 = scmp.eq.s32.totalorder %s17, 0
    %p147 = por %p145, %p146
    %s148 = ssub.s32 %s18, %s30
    %s149 = ssub.s32 %s19, %s26
    %s150 = sor.u32 %s148, %s149
    %p151 = scmp.eq.s32.totalorder %s150, 0
    %s153 = sadd.s32 %s152, 1
    %s154 = scalar_select %p151, %s152, %s153
    %p157 = pneg %p151
    %p158 = scmp.eq.s32.totalorder %s11, 1
    %p159 = por %p157, %p158
    %p160 = scmp.ne.s32.totalorder %s152, %s155
    %p161 = scmp.eq.s32.totalorder %s11, 0
    %p162 = por %p160, %p161
    %p163 = scmp.ne.s32.totalorder %s152, %s155
    %p164 = scmp.eq.s32.totalorder %s16, 1
    %p165 = por %p163, %p164
    %p166 = scmp.ne.s32.totalorder %s155, %s156
    %p167 = scmp.eq.s32.totalorder %s16, 0
    %p168 = por %p166, %p167
    %p169 = scmp.ne.s32.totalorder %s155, %s156
    %p170 = scmp.eq.s32.totalorder %s17, 1
    %p171 = por %p169, %p170
    %p173 = scmp.ne.s32.totalorder %s156, %s172
    %p174 = scmp.eq.s32.totalorder %s17, 0
    %p175 = por %p173, %p174
    %p176 = scmp.le.s32.totalorder 1, %s11
    %p177 = scmp.lt.s32.totalorder %s11, 3
    %p178 = pnand %p176, %p177
    %p179 = pneg %p178
    // Predicated region
    $region9: #{single_stage_forward.3} parent=5 // pred_check
      _
    $region10: #{single_stage_forward.3} parent=5 // pred_check_branch
      %181 = sbr.rel (%p178) target = $region12
    $region11: #{single_stage_forward.3} parent=5 // pred_region
      %s182 = ssub.s32 %s11, 1
      // Predicated region
      $region13: #{single_stage_forward.3} parent=11 // pred_check
        %p183 = pneg %p72
      $region14: #{single_stage_forward.3} parent=11 // pred_check_branch
        %185 = sbr.rel (%p183) target = $region16
      $region15: #{single_stage_forward.3} parent=11 // pred_region
        _
      $region16: #{single_stage_forward.3} parent=11 // pred_fallthru
        _
      // Predicated region
      $region17: #{single_stage_forward.3} parent=11 // pred_check
        %p186 = pneg %p93
      $region18: #{single_stage_forward.3} parent=11 // pred_check_branch
        %188 = sbr.rel (%p186) target = $region20
      $region19: #{single_stage_forward.3} parent=11 // pred_region
        _
      $region20: #{single_stage_forward.3} parent=11 // pred_fallthru
        _
      // Predicated region
      $region21: #{single_stage_forward.3} parent=11 // pred_check
        %p189 = pneg %p114
      $region22: #{single_stage_forward.3} parent=11 // pred_check_branch
        %191 = sbr.rel (%p189) target = $region24
      $region23: #{single_stage_forward.3} parent=11 // pred_region
        _
      $region24: #{single_stage_forward.3} parent=11 // pred_fallthru
        _
    $region12: #{single_stage_forward.3} parent=5 // pred_fallthru
      _
    %p192 = scmp.lt.s32.totalorder %s11, 2
    // Predicated region
    $region25: #{single_stage_forward.3} parent=5 // pred_check
      %p193 = pneg %p192
    $region26: #{single_stage_forward.3} parent=5 // pred_check_branch
      %195 = sbr.rel (%p193) target = $region28
    $region27: #{single_stage_forward.3} parent=5 // pred_region
      // Predicated region
      $region29: #{single_stage_forward.3} parent=27 // pred_check
        %p196 = pneg %p45
      $region30: #{single_stage_forward.3} parent=27 // pred_check_branch
        %198 = sbr.rel (%p196) target = $region32
      $region31: #{single_stage_forward.3} parent=27 // pred_region
        %s199 = smul.u32 2, %s19
        %p200 = scmp.lt.s32.totalorder %s18, 1
        %s201 = scalar_select %p200, %s18, 1
        %p202 = scmp.lt.s32.totalorder %s199, 1
        %s203 = scalar_select %p202, %s199, 1
        %s204 = smul.addr %s201, 2
        %s205 = sadd.s32 %s203, %s204
        %s206 = smul.addr %s205, 4
        %s207 = scalar_lea.vmem %s0, %s206
        %s208 = smul.u32 2, %s19
      $region32: #{single_stage_forward.3} parent=27 // pred_fallthru
        _
      // Predicated region
      $region33: #{single_stage_forward.3} parent=27 // pred_check
        %p209 = pneg %p134
      $region34: #{single_stage_forward.3} parent=27 // pred_check_branch
        %211 = sbr.rel (%p209) target = $region36
      $region35: #{single_stage_forward.3} parent=27 // pred_region
        %p212 = scmp.lt.s32.totalorder %s18, 1
        %s213 = scalar_select %p212, %s18, 1
        %s214 = smul.addr %s213, 4
        %s215 = scalar_lea.vmem %s4, %s214
      $region36: #{single_stage_forward.3} parent=27 // pred_fallthru
        _
    $region28: #{single_stage_forward.3} parent=5 // pred_fallthru
      _
    %p216 = scmp.le.s32.totalorder 1, %s11
    %p217 = scmp.lt.s32.totalorder %s11, 3
    %p218 = pnand %p216, %p217
    %p219 = pneg %p218
    // Predicated region
    $region37: #{single_stage_forward.3} parent=5 // pred_check
      _
    $region38: #{single_stage_forward.3} parent=5 // pred_check_branch
      %221 = sbr.rel (%p218) target = $region40
    $region39: #{single_stage_forward.3} parent=5 // pred_region
      %s222 = ssub.s32 %s11, 1
      %s223 = smul.u32 2, %s21
      %p224 = scmp.lt.s32.totalorder %s20, 1
      %s225 = scalar_select %p224, %s20, 1
      %p226 = scmp.lt.s32.totalorder %s223, 1
      %s227 = scalar_select %p226, %s223, 1
      %s228 = smul.addr %s225, 2
      %s229 = sadd.s32 %s227, %s228
      %s230 = smul.addr %s229, 4
      %s231 = scalar_lea.vmem %s0, %s230
      %p232 = pneg %p51
      %p233 = pneg %p48
      %p234 = pneg %p72
      %p235 = pneg %p69
      %p236 = pneg %p93
      %p237 = pneg %p90
      %p238 = pneg %p114
      %p239 = pneg %p111
      %p240 = scmp.lt.s32.totalorder %s20, 1
      %s241 = scalar_select %p240, %s20, 1
      %s242 = smul.addr %s241, 4
      %s243 = scalar_lea.vmem %s4, %s242
      %p244 = pneg %p140
      %p245 = pneg %p137
      %p246 = pneg %p168
      %p247 = pneg %p165
      %s248 = smul.u32 2, %s21
      %p249 = scmp.lt.s32.totalorder %s20, 1
      %s250 = scalar_select %p249, %s20, 1
      %p251 = scmp.lt.s32.totalorder %s248, 1
      %s252 = scalar_select %p251, %s248, 1
      %s253 = smul.addr %s250, 2
      %s254 = sadd.s32 %s252, %s253
      %s255 = scalar_lea.vmem %s5, %s254
      %s256 = smul.u32 2, %s21
      %p257 = scmp.lt.s32.totalorder %s20, 1
      %s258 = scalar_select %p257, %s20, 1
      %p259 = scmp.lt.s32.totalorder %s256, 1
      %s260 = scalar_select %p259, %s256, 1
      %s261 = smul.addr %s258, 2
      %s262 = sadd.s32 %s260, %s261
      %s263 = smul.addr %s262, 4
      %s264 = scalar_lea.vmem %s0, %s263
      %s265 = smul.u32 2, %s21
      %p266 = scmp.lt.s32.totalorder %s20, 1
      %s267 = scalar_select %p266, %s20, 1
      %s268 = smul.addr %s267, 4
      %s269 = scalar_lea.vmem %s4, %s268
      %s270 = smul.u32 2, %s21
      %p271 = scmp.lt.s32.totalorder %s20, 1
      %s272 = scalar_select %p271, %s20, 1
      %p273 = scmp.lt.s32.totalorder %s270, 1
      %s274 = scalar_select %p273, %s270, 1
      %s275 = smul.addr %s272, 2
      %s276 = sadd.s32 %s274, %s275
      %s277 = scalar_lea.vmem %s5, %s276
      %s278 = smul.u32 2, %s21
      %v279 = vld [vmem:[%s264] sm:$0xff]
      %v280 = vld [vmem:[%s2] sm:$0xff]
      %v281 = vld [vmem:[%s2 + $0x8] sm:$0xff]
      %v282 = vld [vmem:[%s2 + $0x10] sm:$0xff]
      %v283 = vld [vmem:[%s2 + $0x18] sm:$0xff]
      %285 = vset.pattern.permute.xlu0 0
      %286 = vperm.xlu0 %285, %v280
      %v287 = vpop.permute.xlu0 %286
      %290 = vset.pattern.permute.xlu0 0
      %291 = vperm.xlu0 %290, %v281
      %v292 = vpop.permute.xlu0 %291
      %295 = vset.pattern.permute.xlu0 0
      %296 = vperm.xlu0 %295, %v282
      %v297 = vpop.permute.xlu0 %296
      %300 = vset.pattern.permute.xlu0 0
      %301 = vperm.xlu0 %300, %v283
      %v302 = vpop.permute.xlu0 %301
      %v304 = vld [vmem:[%s1] sm:$0xff]
      %v305 = vld [vmem:[%s1 + $0x8] sm:$0xff]
      %v306 = vld [vmem:[%s1 + $0x10] sm:$0xff]
      %v307 = vld [vmem:[%s1 + $0x18] sm:$0xff]
      %309 = vset.pattern.permute.xlu0 0
      %310 = vperm.xlu0 %309, %v304
      %v311 = vpop.permute.xlu0 %310
      %314 = vset.pattern.permute.xlu0 0
      %315 = vperm.xlu0 %314, %v305
      %v316 = vpop.permute.xlu0 %315
      %319 = vset.pattern.permute.xlu0 0
      %320 = vperm.xlu0 %319, %v306
      %v321 = vpop.permute.xlu0 %320
      %324 = vset.pattern.permute.xlu0 0
      %325 = vperm.xlu0 %324, %v307
      %v326 = vpop.permute.xlu0 %325
      %v329 = vlaneseq
      %v330 = vshrl.u32 %v329, 7
      %v331 = vsub.s32 0, %v330
      %v332 = vrot.slane %v279, %v331
      %v333 = vlaneseq
      %v334 = vshrl.u32 %v333, 7
      %v335 = vsub.s32 4, %v334
      %v336 = vrot.slane %v279, %v335
      %v339 = vlaneseq
      %v340 = vshrl.u32 %v339, 7
      %v341 = vsub.s32 0, %v340
      %v342 = vrot.slane %v332, %v341
      %v343 = vlaneseq
      %v344 = vshrl.u32 %v343, 7
      %v345 = vsub.s32 0, %v344
      %v346 = vrot.slane %v336, %v345
      %v347 = vmul.f32 %v311, %v342
      %v348 = vmul.f32 %v311, %v346
      %v349 = vmul.f32 %v316, %v342
      %v350 = vmul.f32 %v316, %v346
      %v351 = vmul.f32 %v321, %v342
      %v352 = vmul.f32 %v321, %v346
      %v353 = vmul.f32 %v326, %v342
      %v354 = vmul.f32 %v326, %v346
      %v355 = vadd.f32 %v287, %v347
      %v356 = vadd.f32 %v287, %v348
      %v357 = vadd.f32 %v292, %v349
      %v358 = vadd.f32 %v292, %v350
      %v359 = vadd.f32 %v297, %v351
      %v360 = vadd.f32 %v297, %v352
      %v361 = vadd.f32 %v302, %v353
      %v362 = vadd.f32 %v302, %v354
      %363 = vset.pattern.permute.xlu0 1
      %364 = vperm.xlu0 %363, %v304
      %v365 = vpop.permute.xlu0 %364
      %367 = vset.pattern.permute.xlu0 1
      %368 = vperm.xlu0 %367, %v305
      %v369 = vpop.permute.xlu0 %368
      %371 = vset.pattern.permute.xlu0 1
      %372 = vperm.xlu0 %371, %v306
      %v373 = vpop.permute.xlu0 %372
      %375 = vset.pattern.permute.xlu0 1
      %376 = vperm.xlu0 %375, %v307
      %v377 = vpop.permute.xlu0 %376
      %v379 = vlaneseq
      %v380 = vshrl.u32 %v379, 7
      %v381 = vsub.s32 1, %v380
      %v382 = vrot.slane %v279, %v381
      %v383 = vlaneseq
      %v384 = vshrl.u32 %v383, 7
      %v385 = vsub.s32 5, %v384
      %v386 = vrot.slane %v279, %v385
      %v389 = vlaneseq
      %v390 = vshrl.u32 %v389, 7
      %v391 = vsub.s32 1, %v390
      %v392 = vrot.slane %v382, %v391
      %v393 = vlaneseq
      %v394 = vshrl.u32 %v393, 7
      %v395 = vsub.s32 1, %v394
      %v396 = vrot.slane %v386, %v395
      %v397 = vmul.f32 %v365, %v392
      %v398 = vmul.f32 %v365, %v396
      %v399 = vmul.f32 %v369, %v392
      %v400 = vmul.f32 %v369, %v396
      %v401 = vmul.f32 %v373, %v392
      %v402 = vmul.f32 %v373, %v396
      %v403 = vmul.f32 %v377, %v392
      %v404 = vmul.f32 %v377, %v396
      %v405 = vadd.f32 %v355, %v397
      %v406 = vadd.f32 %v356, %v398
      %v407 = vadd.f32 %v357, %v399
      %v408 = vadd.f32 %v358, %v400
      %v409 = vadd.f32 %v359, %v401
      %v410 = vadd.f32 %v360, %v402
      %v411 = vadd.f32 %v361, %v403
      %v412 = vadd.f32 %v362, %v404
      %413 = vset.pattern.permute.xlu0 2
      %414 = vperm.xlu0 %413, %v304
      %v415 = vpop.permute.xlu0 %414
      %417 = vset.pattern.permute.xlu0 2
      %418 = vperm.xlu0 %417, %v305
      %v419 = vpop.permute.xlu0 %418
      %421 = vset.pattern.permute.xlu0 2
      %422 = vperm.xlu0 %421, %v306
      %v423 = vpop.permute.xlu0 %422
      %425 = vset.pattern.permute.xlu0 2
      %426 = vperm.xlu0 %425, %v307
      %v427 = vpop.permute.xlu0 %426
      %v429 = vlaneseq
      %v430 = vshrl.u32 %v429, 7
      %v431 = vsub.s32 2, %v430
      %v432 = vrot.slane %v279, %v431
      %v433 = vlaneseq
      %v434 = vshrl.u32 %v433, 7
      %v435 = vsub.s32 6, %v434
      %v436 = vrot.slane %v279, %v435
      %v439 = vlaneseq
      %v440 = vshrl.u32 %v439, 7
      %v441 = vsub.s32 2, %v440
      %v442 = vrot.slane %v432, %v441
      %v443 = vlaneseq
      %v444 = vshrl.u32 %v443, 7
      %v445 = vsub.s32 2, %v444
      %v446 = vrot.slane %v436, %v445
      %v447 = vmul.f32 %v415, %v442
      %v448 = vmul.f32 %v415, %v446
      %v449 = vmul.f32 %v419, %v442
      %v450 = vmul.f32 %v419, %v446
      %v451 = vmul.f32 %v423, %v442
      %v452 = vmul.f32 %v423, %v446
      %v453 = vmul.f32 %v427, %v442
      %v454 = vmul.f32 %v427, %v446
      %v455 = vadd.f32 %v405, %v447
      %v456 = vadd.f32 %v406, %v448
      %v457 = vadd.f32 %v407, %v449
      %v458 = vadd.f32 %v408, %v450
      %v459 = vadd.f32 %v409, %v451
      %v460 = vadd.f32 %v410, %v452
      %v461 = vadd.f32 %v411, %v453
      %v462 = vadd.f32 %v412, %v454
      %463 = vset.pattern.permute.xlu0 3
      %464 = vperm.xlu0 %463, %v304
      %v465 = vpop.permute.xlu0 %464
      %467 = vset.pattern.permute.xlu0 3
      %468 = vperm.xlu0 %467, %v305
      %v469 = vpop.permute.xlu0 %468
      %471 = vset.pattern.permute.xlu0 3
      %472 = vperm.xlu0 %471, %v306
      %v473 = vpop.permute.xlu0 %472
      %475 = vset.pattern.permute.xlu0 3
      %476 = vperm.xlu0 %475, %v307
      %v477 = vpop.permute.xlu0 %476
      %v479 = vlaneseq
      %v480 = vshrl.u32 %v479, 7
      %v481 = vsub.s32 3, %v480
      %v482 = vrot.slane %v279, %v481
      %v483 = vlaneseq
      %v484 = vshrl.u32 %v483, 7
      %v485 = vsub.s32 7, %v484
      %v486 = vrot.slane %v279, %v485
      %v489 = vlaneseq
      %v490 = vshrl.u32 %v489, 7
      %v491 = vsub.s32 3, %v490
      %v492 = vrot.slane %v482, %v491
      %v493 = vlaneseq
      %v494 = vshrl.u32 %v493, 7
      %v495 = vsub.s32 3, %v494
      %v496 = vrot.slane %v486, %v495
      %v497 = vmul.f32 %v465, %v492
      %v498 = vmul.f32 %v465, %v496
      %v499 = vmul.f32 %v469, %v492
      %v500 = vmul.f32 %v469, %v496
      %v501 = vmul.f32 %v473, %v492
      %v502 = vmul.f32 %v473, %v496
      %v503 = vmul.f32 %v477, %v492
      %v504 = vmul.f32 %v477, %v496
      %v505 = vadd.f32 %v455, %v497
      %v506 = vadd.f32 %v456, %v498
      %v507 = vadd.f32 %v457, %v499
      %v508 = vadd.f32 %v458, %v500
      %v509 = vadd.f32 %v459, %v501
      %v510 = vadd.f32 %v460, %v502
      %v511 = vadd.f32 %v461, %v503
      %v512 = vadd.f32 %v462, %v504
      %v513 = vmax.f32 %v505, 0.0
      %v514 = vmax.f32 %v506, 0.0
      %v515 = vmax.f32 %v507, 0.0
      %v516 = vmax.f32 %v508, 0.0
      %v517 = vmax.f32 %v509, 0.0
      %v518 = vmax.f32 %v510, 0.0
      %v519 = vmax.f32 %v511, 0.0
      %v520 = vmax.f32 %v512, 0.0
      %v521 = vld [vmem:[%s3] sm:$0xf]
      %vm522 = vcmask 261120
      %v524 = vsel %vm522, %v521, 0
      %526 = vmatprep.subr.mxu0 0.0
      %527 = vmatpush1.msra.mxu0 0.0
      %528 = vmatprep.subr.mxu0 0.0
      %529 = vmatpush1.msra.mxu0 0.0
      %530 = vmatprep.subr.mxu0 0.0
      %531 = vmatpush1.msra.mxu0 0.0
      %532 = vmatprep.subr.mxu0 0.0
      %533 = vmatpush1.msra.mxu0 0.0
      %534 = vmatprep.subr.mxu0 0.0
      %535 = vmatpush1.msra.mxu0 0.0
      %536 = vmatprep.subr.mxu0 0.0
      %537 = vmatpush1.msra.mxu0 0.0
      %538 = vmatprep.subr.mxu0 0.0
      %539 = vmatpush1.msra.mxu0 0.0
      %540 = vmatprep.subr.mxu0 0.0
      %541 = vmatpush1.msra.mxu0 0.0
      %542 = vmatprep.subr.mxu0 0.0
      %543 = vmatpush1.msra.mxu0 0.0
      %544 = vmatprep.subr.mxu0 0.0
      %545 = vmatpush1.msra.mxu0 0.0
      %546 = vmatprep.subr.mxu0 0.0
      %547 = vmatpush1.msra.mxu0 0.0
      %548 = vmatprep.subr.mxu0 0.0
      %549 = vmatpush1.msra.mxu0 0.0
      %550 = vmatprep.subr.mxu0 %v520
      %551 = vmatpush1.msra.mxu0 %v519
      %552 = vmatprep.subr.mxu0 %v518
      %553 = vmatpush1.msra.mxu0 %v517
      %554 = vmatprep.subr.mxu0 %v516
      %555 = vmatpush1.msra.mxu0 %v515
      %556 = vmatprep.subr.mxu0 %v514
      %557 = vmatpush1.msra.mxu0 %v513
      %558 = vmatprep.subr.mxu0 0.0
      %559 = vmatpush2.msra.mxu0 0.0
      %560 = vmatprep.subr.mxu0 0.0
      %561 = vmatpush2.msra.mxu0 0.0
      %562 = vmatprep.subr.mxu0 0.0
      %563 = vmatpush2.msra.mxu0 0.0
      %564 = vmatprep.subr.mxu0 0.0
      %565 = vmatpush2.msra.mxu0 0.0
      %566 = vmatprep.subr.mxu0 0.0
      %567 = vmatpush2.msra.mxu0 0.0
      %568 = vmatprep.subr.mxu0 0.0
      %569 = vmatpush2.msra.mxu0 0.0
      %570 = vmatprep.subr.mxu0 0.0
      %571 = vmatpush2.msra.mxu0 0.0
      %572 = vmatprep.subr.mxu0 0.0
      %573 = vmatpush2.msra.mxu0 0.0
      %574 = vmatprep.subr.mxu0 0.0
      %575 = vmatpush2.msra.mxu0 0.0
      %576 = vmatprep.subr.mxu0 0.0
      %577 = vmatpush2.msra.mxu0 0.0
      %578 = vmatprep.subr.mxu0 0.0
      %579 = vmatpush2.msra.mxu0 0.0
      %580 = vmatprep.subr.mxu0 0.0
      %581 = vmatpush2.msra.mxu0 0.0
      %582 = vmatprep.subr.mxu0 0.0
      %583 = vmatpush2.msra.mxu0 0.0
      %584 = vmatprep.subr.mxu0 0.0
      %585 = vmatpush2.msra.mxu0 0.0
      %586 = vmatprep.subr.mxu0 0.0
      %587 = vmatpush2.msra.mxu0 0.0
      %588 = vmatprep.subr.mxu0 0.0
      %589 = vmatpush2.msra.mxu0 0.0
      %590 = vmatprep.mubr.f32.mxu0 0.0
      %591 = vmatmul.mubr.f32.gmra.mxu0 %v524
      %v592 = vpop.f32.mrf.mxu0
      %v593 = vadd.f32 0.0, %v592
      %v594 = vpop.f32.mrf.mxu0
      %v595 = vadd.f32 0.0, %v594
      %596 = vdwg.mxu0
      %v597 = vmax.f32 %v593, 0.0
      %v598 = vmax.f32 %v595, 0.0
      %v599 = vld [vmem:[%s269] sm:$0xf]
      %v600 = vadd.f32 %v599, 1e-08
      %v601 = vrcp.pop %v600
      %603 = vset.pattern.permute.xlu0 0
      %604 = vperm.xlu0 %603, %v601
      %v605 = vpop.permute.xlu0 %604
      %v607 = vmul.f32 %v597, %v605
      %v608 = vmul.f32 %v598, %v605
      %v611 = vrot.slane %v607, 7
      %v612 = vrot.slane %v608, 7
      %vm615 = vcmp.gt.f32.partialorder %v607, %v611
      %vm616 = vcmp.gt.f32.partialorder %v608, %v612
      %v617 = vsel %vm615, %v607, %v611
      %v618 = vsel %vm616, %v608, %v612
      %v619 = vsel %vm615, 1, 0
      %v620 = vsel %vm616, 1, 0
      %v623 = vrot.slane %v617, 7
      %v624 = vrot.slane %v618, 7
      %vm627 = vcmp.gt.f32.partialorder %v607, %v623
      %vm628 = vcmp.gt.f32.partialorder %v608, %v624
      %v629 = vsel %vm627, %v607, %v623
      %v630 = vsel %vm628, %v608, %v624
      %v631 = vrot.slane %v619, 7
      %v632 = vrot.slane %v620, 7
      %v633 = vsel %vm627, 2, %v631
      %v634 = vsel %vm628, 2, %v632
      %v637 = vrot.slane %v629, 7
      %v638 = vrot.slane %v630, 7
      %vm641 = vcmp.gt.f32.partialorder %v607, %v637
      %vm642 = vcmp.gt.f32.partialorder %v608, %v638
      %v643 = vsel %vm641, %v607, %v637
      %v644 = vsel %vm642, %v608, %v638
      %v645 = vrot.slane %v633, 7
      %v646 = vrot.slane %v634, 7
      %v647 = vsel %vm641, 3, %v645
      %v648 = vsel %vm642, 3, %v646
      %vm649 = vcmp.lt.f32.partialorder %v643, 0.25
      %vm650 = vcmp.lt.f32.partialorder %v644, 0.25
      %v651 = vsel %vm649, 255, %v647
      %v652 = vsel %vm650, 255, %v648
      %v653 = vcombine.low %v651, %v652
      %v655 = vunpack.c.l.s4 1966171168
      %v656 = vunpack.c.0.s8 %v655
      %v657 = vlaneseq
      %v658 = vshrl.u32 %v657, 7
      %v659 = vsub.s32 %v656, %v658
      %v660 = vrot.slane %v653, %v659
      %v661 = vcombine.high %v660, %v660
      %v663 = vunpack.c.l.s4 1966171168
      %v664 = vunpack.c.0.s8 %v663
      %v665 = vlaneseq
      %v666 = vshrl.u32 %v665, 7
      %v667 = vsub.s32 %v664, %v666
      %v668 = vrot.slane %v661, %v667
      %v669 = vcombine.high %v668, %v668
      %v670 = vlaneseq
      %vm671 = vcmp.ge.s32.totalorder %v670, 0
      %vm672 = vcmp.lt.s32.totalorder %v670, 256
      %vm673 = vmand %vm671, %vm672
      %674 = vst.msk [vmem:[%s277] sm:$0x3] %vm673, %v669
      %s675 = smul.u32 2, %s21
      %p676 = scmp.lt.s32.totalorder %s20, 1
      %s677 = scalar_select %p676, %s20, 1
      %p678 = scmp.lt.s32.totalorder %s675, 1
      %s679 = scalar_select %p678, %s675, 1
      %s680 = smul.addr %s677, 2
      %s681 = sadd.s32 %s679, %s680
      %s682 = scalar_lea.vmem %s5, %s681
      // Predicated region
      $region41: #{single_stage_forward.3} parent=39 // pred_check
        %p683 = pneg %p165
      $region42: #{single_stage_forward.3} parent=39 // pred_check_branch
        %685 = sbr.rel (%p683) target = $region44
      $region43: #{single_stage_forward.3} parent=39 // pred_region
        %s686 = smul.u32 2, %s21
      $region44: #{single_stage_forward.3} parent=39 // pred_fallthru
        _
    $region40: #{single_stage_forward.3} parent=5 // pred_fallthru
      _
    %p687 = scmp.le.s32.totalorder 2, %s11
    // Predicated region
    $region45: #{single_stage_forward.3} parent=5 // pred_check
      %p688 = pneg %p687
    $region46: #{single_stage_forward.3} parent=5 // pred_check_branch
      %690 = sbr.rel (%p688) target = $region48
    $region47: #{single_stage_forward.3} parent=5 // pred_region
      %s691 = ssub.s32 %s11, 2
      // Predicated region
      $region49: #{single_stage_forward.3} parent=47 // pred_check
        %p692 = pneg %p171
      $region50: #{single_stage_forward.3} parent=47 // pred_check_branch
        %694 = sbr.rel (%p692) target = $region52
      $region51: #{single_stage_forward.3} parent=47 // pred_region
        %s695 = smul.u32 2, %s23
        %p696 = scmp.lt.s32.totalorder %s22, 1
        %s697 = scalar_select %p696, %s22, 1
        %p698 = scmp.lt.s32.totalorder %s695, 1
        %s699 = scalar_select %p698, %s695, 1
        %s700 = smul.addr %s697, 2
        %s701 = sadd.s32 %s699, %s700
        %s702 = scalar_lea.vmem %s5, %s701
      $region52: #{single_stage_forward.3} parent=47 // pred_fallthru
        _
    $region48: #{single_stage_forward.3} parent=5 // pred_fallthru
      _
  $region6: #{single_stage_forward.3} parent=0 // loop_footer
    %s15 = sadd.s32 1, %s11
  $region7: #{single_stage_forward.3} parent=0 // loop_footer_branch
    %10 = sbr.rel target = $region3
  $region8: #{single_stage_forward.3} parent=0 // loop_exit
    _

</llo_original>
